<compile_context>
chip_gen: v5e
topology: v5e:2x2
jax: 0.10.0
libtpu: 0.0.40
codegen_flags: <defaults>
</compile_context>

<pallas_src>
import functools

import jax
import jax.numpy as jnp
from jax.experimental import pallas as pl
from jax.experimental.pallas import tpu as pltpu

LANE = 128  # TPU lane width; conv out-channels and head outputs are padded to this.


# ----------------------------------------------------------------------------
# Pallas kernels
# ----------------------------------------------------------------------------
def gemm_bias_relu_kernel(x_ref, w_ref, b_ref, o_ref):
    """o = relu(x @ w + b) for one M-tile.

    x:(TM,K) bf16   w:(K,128) bf16 (VMEM-resident across the grid)
    b:(1,128) f32   o:(TM,128) f32
    """
    acc = jnp.dot(x_ref[...], w_ref[...], preferred_element_type=jnp.float32)
    o_ref[...] = jnp.maximum(acc + b_ref[...], 0.0)


def dueling_head_kernel(x_ref, w1_ref, b1_ref, w2_ref, b2_ref, o_ref, *, num_actions):
    """Fused dueling head (value + advantage streams + combine).

    w1:(F,512) = [wv1 | wa1]           b1:(1,512) = [bv1 | ba1]
    w2:(512,128): column 0 packs the value Linear(256,1) (rows 0..255),
                  columns 1..A pack the advantage Linear(256,A) (rows 256..511),
                  all other entries are exactly zero.  b2 packed the same way.
    o:(B,128): column 0/padding are garbage; Q values live in columns 1..A.
    """
    x = x_ref[...].astype(jnp.bfloat16)
    h = jnp.maximum(
        jnp.dot(x, w1_ref[...], preferred_element_type=jnp.float32) + b1_ref[...],
        0.0)
    y = jnp.dot(h.astype(jnp.bfloat16), w2_ref[...],
                preferred_element_type=jnp.float32) + b2_ref[...]        # (B,128)
    value = y[:, 0:1]                                                    # (B,1)
    # Columns 1..A of y hold the advantages; columns A+1.. are exactly zero,
    # so the advantage sum is sum(y) - value and the mean divides by A.
    adv_mean = (jnp.sum(y, axis=1, keepdims=True) - value) * (1.0 / num_actions)
    o_ref[...] = value + y - adv_mean   # lane-dense store; wrapper slices [:, 1:1+A]


# ----------------------------------------------------------------------------
# Plain-JAX glue: im2col (NHWC), layer wrappers
# ----------------------------------------------------------------------------
def _round_up(x, m):
    return (x + m - 1) // m * m


def _im2col_nhwc(x, K, S):
    """NHWC patch extraction; feature ordering (c, kh, kw) matches
    PyTorch's weight.reshape(O, C*K*K)."""
    B, H, W, C = x.shape
    OH = (H - K) // S + 1
    OW = (W - K) // S + 1
    cols = [x[:, kh:kh + OH * S:S, kw:kw + OW * S:S, :]
            for kh in range(K) for kw in range(K)]
    p = jnp.stack(cols, axis=-1)                     # (B, OH, OW, C, K*K)
    return p.reshape(B, OH, OW, C * K * K), OH, OW


def conv_relu(x_nhwc, wm, bias, *, ksize, stride, c_out, tm_max=512):
    """Conv2d(stride, no padding) + ReLU via im2col + tiled Pallas GEMM.

    wm:(C*K*K, 128) bf16 zero-padded along N;  bias:(1,128) f32 zero-padded.
    """
    # TODO(synk): stream the im2col patch extraction inside the kernel (manual
    # DMA from an HBM ref) instead of materializing the patch matrix in HBM.
    B = x_nhwc.shape[0]
    patches, OH, OW = _im2col_nhwc(x_nhwc, ksize, stride)
    M = B * OH * OW
    Kdim = patches.shape[-1]
    xm = patches.reshape(M, Kdim).astype(jnp.bfloat16)

    TM = min(tm_max, _round_up(M, 8))
    Mp = _round_up(M, TM)
    if Mp != M:
        xm = jnp.pad(xm, ((0, Mp - M), (0, 0)))

    out = pl.pallas_call(
        gemm_bias_relu_kernel,
        out_shape=jax.ShapeDtypeStruct((Mp, LANE), jnp.float32),
        grid_spec=pltpu.PrefetchScalarGridSpec(
            num_scalar_prefetch=0,
            grid=(Mp // TM,),
            in_specs=[
                pl.BlockSpec((TM, Kdim), lambda i: (i, 0)),
                pl.BlockSpec((Kdim, LANE), lambda i: (0, 0)),  # weights stay resident
                pl.BlockSpec((1, LANE), lambda i: (0, 0)),     # bias stays resident
            ],
            out_specs=pl.BlockSpec((TM, LANE), lambda i: (i, 0)),
        ),
        compiler_params=pltpu.CompilerParams(
            dimension_semantics=("parallel",),       # megacore splits the M tiles
            vmem_limit_bytes=32 * 1024 * 1024,
        ),
    )(xm, wm, bias)

    return out[:M, :c_out].reshape(B, OH, OW, c_out)


def dueling_head(feats, w1, b1, w2, b2, *, num_actions):
    """Fused dueling head; feats:(B,F) f32, returns (B, num_actions)."""
    B = feats.shape[0]
    out = pl.pallas_call(
        functools.partial(dueling_head_kernel, num_actions=num_actions),
        out_shape=jax.ShapeDtypeStruct((B, LANE), jnp.float32),
    )(feats, w1, b1, w2, b2)
    return out[:, 1:1 + num_actions]


def dueling_q_network(x_nchw, kp, *, num_actions):
    """Full forward pass: conv trunk (NHWC internally) -> flatten -> head."""
    x = jnp.transpose(x_nchw, (0, 2, 3, 1))              # NCHW -> NHWC once
    x = conv_relu(x, kp["conv1_w"], kp["conv1_b"], ksize=8, stride=4, c_out=32)
    x = conv_relu(x, kp["conv2_w"], kp["conv2_b"], ksize=4, stride=2, c_out=64)
    x = conv_relu(x, kp["conv3_w"], kp["conv3_b"], ksize=3, stride=1, c_out=64)
    B = x.shape[0]
    feats = x.reshape(B, -1)   # NHWC flatten; head weights were row-permuted to match
    return dueling_head(feats, kp["w1"], kp["b1"], kp["w2"], kp["b2"],
                        num_actions=num_actions)


# ----------------------------------------------------------------------------
# Parameters: PyTorch-layout init + kernel-layout preparation
# ----------------------------------------------------------------------------
def init_torch_params(key, input_channels, input_hw, output_dim):
    """PyTorch-layout params with uniform +-1/sqrt(fan_in) init."""
    def uniform(k, shape, fan_in):
        bound = 1.0 / jnp.sqrt(jnp.float32(fan_in))
        return jax.random.uniform(k, shape, jnp.float32, -bound, bound)

    keys = jax.random.split(key, 14)
    C = input_channels

    def out_hw(h, k, s):
        return (h - k) // s + 1
    h3 = out_hw(out_hw(out_hw(input_hw, 8, 4), 4, 2), 3, 1)
    feature_dim = 64 * h3 * h3

    tp = {
        "conv1_w": uniform(keys[0], (32, C, 8, 8), C * 64),
        "conv1_b": uniform(keys[1], (32,), C * 64),
        "conv2_w": uniform(keys[2], (64, 32, 4, 4), 32 * 16),
        "conv2_b": uniform(keys[3], (64,), 32 * 16),
        "conv3_w": uniform(keys[4], (64, 64, 3, 3), 64 * 9),
        "conv3_b": uniform(keys[5], (64,), 64 * 9),
        "value1_w": uniform(keys[6], (256, feature_dim), feature_dim),
        "value1_b": uniform(keys[7], (256,), feature_dim),
        "value2_w": uniform(keys[8], (1, 256), 256),
        "value2_b": uniform(keys[9], (1,), 256),
        "adv1_w": uniform(keys[10], (256, feature_dim), feature_dim),
        "adv1_b": uniform(keys[11], (256,), feature_dim),
        "adv2_w": uniform(keys[12], (output_dim, 256), 256),
        "adv2_b": uniform(keys[13], (output_dim,), 256),
    }
    return tp, feature_dim, h3


def prepare_kernel_params(tp, head_oh, head_ow, output_dim):
    """Convert PyTorch-layout params into padded / fused kernel layouts."""
    kp = {}
    # Conv GEMM weights: (O,C,K,K) -> (C*K*K, O) -> pad N to 128, bf16.
    for name in ("conv1", "conv2", "conv3"):
        w = tp[f"{name}_w"]
        O = w.shape[0]
        assert O <= LANE
        wm = jnp.transpose(w.reshape(O, -1))                         # (C*K*K, O)
        kp[f"{name}_w"] = jnp.pad(wm, ((0, 0), (0, LANE - O))).astype(jnp.bfloat16)
        kp[f"{name}_b"] = jnp.pad(tp[f"{name}_b"], (0, LANE - O)
                                  ).reshape(1, LANE).astype(jnp.float32)

    # Head: bake the NCHW-flatten permutation into the first-layer row order so
    # the NHWC flatten of the kernel pipeline is numerically identical.
    C3 = 64
    F = head_oh * head_ow * C3
    idx = jnp.arange(F)
    oh = idx // (head_ow * C3)
    rem = idx % (head_ow * C3)
    ow = rem // C3
    c = rem % C3
    perm = c * (head_oh * head_ow) + oh * head_ow + ow               # NHWC -> NCHW row
    wv1 = jnp.transpose(tp["value1_w"])[perm]                        # (F,256)
    wa1 = jnp.transpose(tp["adv1_w"])[perm]                          # (F,256)
    kp["w1"] = jnp.concatenate([wv1, wa1], axis=1).astype(jnp.bfloat16)   # (F,512)
    kp["b1"] = jnp.concatenate([tp["value1_b"], tp["adv1_b"]]
                               ).reshape(1, 512).astype(jnp.float32)

    A = output_dim
    assert A + 1 <= LANE
    w2 = jnp.zeros((512, LANE), jnp.float32)
    w2 = w2.at[:256, 0].set(tp["value2_w"][0])                       # value column
    w2 = w2.at[256:, 1:1 + A].set(jnp.transpose(tp["adv2_w"]))       # advantage cols
    kp["w2"] = w2.astype(jnp.bfloat16)
    b2 = jnp.zeros((1, LANE), jnp.float32)
    b2 = b2.at[0, 0].set(tp["value2_b"][0])
    b2 = b2.at[0, 1:1 + A].set(tp["adv2_b"])
    kp["b2"] = b2
    return kp


# ----------------------------------------------------------------------------
# Plain-JAX float32 reference of the exact PyTorch forward (for tolerance check)
# ----------------------------------------------------------------------------
def reference_forward(x_nchw, tp):
    y = x_nchw
    for name, s in (("conv1", 4), ("conv2", 2), ("conv3", 1)):
        y = jax.lax.conv_general_dilated(
            y, tp[f"{name}_w"], window_strides=(s, s), padding="VALID",
            dimension_numbers=("NCHW", "OIHW", "NCHW"))
        y = jnp.maximum(y + tp[f"{name}_b"][None, :, None, None], 0.0)
    B = y.shape[0]
    f = y.reshape(B, -1)                                             # NCHW flatten
    hv = jnp.maximum(f @ jnp.transpose(tp["value1_w"]) + tp["value1_b"], 0.0)
    value = hv @ jnp.transpose(tp["value2_w"]) + tp["value2_b"]
    ha = jnp.maximum(f @ jnp.transpose(tp["adv1_w"]) + tp["adv1_b"], 0.0)
    adv = ha @ jnp.transpose(tp["adv2_w"]) + tp["adv2_b"]
    return value + adv - adv.mean(axis=1, keepdims=True)


# ----------------------------------------------------------------------------
if __name__ == "__main__":
    key = jax.random.PRNGKey(0)
    k_in, k_par = jax.random.split(key)

    # Small Atari-like input: batch=2, channels=4, 36x36 spatial.
    # Conv trunk: 36 -> 8 -> 3 -> 1  => feature_dim = 64.
    B, C, H = 2, 4, 36
    OUTPUT_DIM = 6

    x = jax.random.normal(k_in, (B, C, H, H), dtype=jnp.float32)
    torch_params, feature_dim, h3 = init_torch_params(k_par, C, H, OUTPUT_DIM)
    kernel_params = prepare_kernel_params(torch_params, h3, h3, OUTPUT_DIM)

    fwd = jax.jit(functools.partial(dueling_q_network, num_actions=OUTPUT_DIM))
    q = jax.block_until_ready(fwd(x, kernel_params))

    assert q.shape == (B, OUTPUT_DIM), q.shape
    assert bool(jnp.all(jnp.isfinite(q)))

    # Tolerance check vs float32 reference (bf16 MXU operands, f32 accumulation).
    q_ref = reference_forward(x, torch_params)
    max_err = float(jnp.max(jnp.abs(q - q_ref)))
    assert max_err < 0.1, f"max abs error vs reference: {max_err}"

    print("KERNEL_OK")
</pallas_src>

<mosaic_0001>
module attributes {stable_mosaic.version = 11 : i64} {
  func.func @gemm_bias_relu_kernel(%arg0: i32, %arg1: memref<128x256xbf16, #tpu.memory_space<vmem>>, %arg2: memref<256x128xbf16, #tpu.memory_space<vmem>>, %arg3: memref<1x128xf32, #tpu.memory_space<vmem>>, %arg4: memref<128x128xf32, #tpu.memory_space<vmem>>) attributes {dimension_semantics = [#tpu.dimension_semantics<parallel>], iteration_bounds = array<i64: 1>, scalar_prefetch = 0 : i64, scratch_operands = 0 : i64, tpu.core_type = #tpu.core_type<tc>, window_params = [{transform_indices = @transform_0, window_bounds = array<i64: 128, 256>}, {pipeline_mode = #tpu.pipeline_mode<synchronous>, transform_indices = @transform_1, window_bounds = array<i64: 256, 128>}, {pipeline_mode = #tpu.pipeline_mode<synchronous>, transform_indices = @transform_2, window_bounds = array<i64: 1, 128>}, {transform_indices = @transform_3, window_bounds = array<i64: 128, 128>}]} {
    %c0 = arith.constant 0 : index
    %c0_0 = arith.constant 0 : index
    %0 = vector.load %arg1[%c0, %c0_0] : memref<128x256xbf16, #tpu.memory_space<vmem>>, vector<128x256xbf16>
    %c0_1 = arith.constant 0 : index
    %c0_2 = arith.constant 0 : index
    %1 = vector.load %arg2[%c0_1, %c0_2] : memref<256x128xbf16, #tpu.memory_space<vmem>>, vector<256x128xbf16>
    %cst = arith.constant dense<0.000000e+00> : vector<128x128xf32>
    %2 = tpu.matmul %0, %1, %cst {dimension_numbers = #tpu.dot_dimension_numbers<[1], [0], [0], [1], [0, 0, 1, 1], [], []>} : vector<128x256xbf16>, vector<256x128xbf16>, vector<128x128xf32> -> vector<128x128xf32>
    %c0_3 = arith.constant 0 : index
    %c0_4 = arith.constant 0 : index
    %3 = vector.load %arg3[%c0_3, %c0_4] : memref<1x128xf32, #tpu.memory_space<vmem>>, vector<1x128xf32>
    %4 = vector.broadcast %3 : vector<1x128xf32> to vector<128x128xf32>
    %5 = arith.addf %2, %4 : vector<128x128xf32>
    %cst_5 = arith.constant 0.000000e+00 : f32
    %6 = vector.broadcast %cst_5 : f32 to vector<128x128xf32>
    %7 = arith.maximumf %5, %6 : vector<128x128xf32>
    %c0_6 = arith.constant 0 : index
    %c0_7 = arith.constant 0 : index
    %8 = vector.load %arg4[%c0_6, %c0_7] : memref<128x128xf32, #tpu.memory_space<vmem>>, vector<128x128xf32>
    tpu.vector_store %arg4[%c0_6, %c0_7], %7 {strides = array<i32>} : memref<128x128xf32, #tpu.memory_space<vmem>>, vector<128x128xf32>,
    return
  }
  func.func @transform_0(%arg0: i32) -> (i32, i32) {
    %c0_i32 = arith.constant 0 : i32
    %c0_i32_0 = arith.constant 0 : i32
    return %arg0, %c0_i32 : i32, i32
  }
  func.func @transform_1(%arg0: i32) -> (i32, i32) {
    %c0_i32 = arith.constant 0 : i32
    %c0_i32_0 = arith.constant 0 : i32
    %c0_i32_1 = arith.constant 0 : i32
    return %c0_i32, %c0_i32_0 : i32, i32
  }
  func.func @transform_2(%arg0: i32) -> (i32, i32) {
    %c0_i32 = arith.constant 0 : i32
    %c0_i32_0 = arith.constant 0 : i32
    %c0_i32_1 = arith.constant 0 : i32
    return %c0_i32, %c0_i32_0 : i32, i32
  }
  func.func @transform_3(%arg0: i32) -> (i32, i32) {
    %c0_i32 = arith.constant 0 : i32
    %c0_i32_0 = arith.constant 0 : i32
    return %arg0, %c0_i32 : i32, i32
  }
}

module attributes {stable_mosaic.version = 11 : i64} {
  func.func @gemm_bias_relu_kernel(%arg0: i32, %arg1: memref<24x512xbf16, #tpu.memory_space<vmem>>, %arg2: memref<512x128xbf16, #tpu.memory_space<vmem>>, %arg3: memref<1x128xf32, #tpu.memory_space<vmem>>, %arg4: memref<24x128xf32, #tpu.memory_space<vmem>>) attributes {dimension_semantics = [#tpu.dimension_semantics<parallel>], iteration_bounds = array<i64: 1>, scalar_prefetch = 0 : i64, scratch_operands = 0 : i64, tpu.core_type = #tpu.core_type<tc>, window_params = [{transform_indices = @transform_0, window_bounds = array<i64: 24, 512>}, {pipeline_mode = #tpu.pipeline_mode<synchronous>, transform_indices = @transform_1, window_bounds = array<i64: 512, 128>}, {pipeline_mode = #tpu.pipeline_mode<synchronous>, transform_indices = @transform_2, window_bounds = array<i64: 1, 128>}, {transform_indices = @transform_3, window_bounds = array<i64: 24, 128>}]} {
    %c0 = arith.constant 0 : index
    %c0_0 = arith.constant 0 : index
    %0 = vector.load %arg1[%c0, %c0_0] : memref<24x512xbf16, #tpu.memory_space<vmem>>, vector<24x512xbf16>
    %c0_1 = arith.constant 0 : index
    %c0_2 = arith.constant 0 : index
    %1 = vector.load %arg2[%c0_1, %c0_2] : memref<512x128xbf16, #tpu.memory_space<vmem>>, vector<512x128xbf16>
    %cst = arith.constant dense<0.000000e+00> : vector<24x128xf32>
    %2 = tpu.matmul %0, %1, %cst {dimension_numbers = #tpu.dot_dimension_numbers<[1], [0], [0], [1], [0, 0, 1, 1], [], []>} : vector<24x512xbf16>, vector<512x128xbf16>, vector<24x128xf32> -> vector<24x128xf32>
    %c0_3 = arith.constant 0 : index
    %c0_4 = arith.constant 0 : index
    %3 = vector.load %arg3[%c0_3, %c0_4] : memref<1x128xf32, #tpu.memory_space<vmem>>, vector<1x128xf32>
    %4 = vector.broadcast %3 : vector<1x128xf32> to vector<24x128xf32>
    %5 = arith.addf %2, %4 : vector<24x128xf32>
    %cst_5 = arith.constant 0.000000e+00 : f32
    %6 = vector.broadcast %cst_5 : f32 to vector<24x128xf32>
    %7 = arith.maximumf %5, %6 : vector<24x128xf32>
    %c0_6 = arith.constant 0 : index
    %c0_7 = arith.constant 0 : index
    %8 = vector.load %arg4[%c0_6, %c0_7] : memref<24x128xf32, #tpu.memory_space<vmem>>, vector<24x128xf32>
    tpu.vector_store %arg4[%c0_6, %c0_7], %7 {strides = array<i32>} : memref<24x128xf32, #tpu.memory_space<vmem>>, vector<24x128xf32>,
    return
  }
  func.func @transform_0(%arg0: i32) -> (i32, i32) {
    %c0_i32 = arith.constant 0 : i32
    %c0_i32_0 = arith.constant 0 : i32
    return %arg0, %c0_i32 : i32, i32
  }
  func.func @transform_1(%arg0: i32) -> (i32, i32) {
    %c0_i32 = arith.constant 0 : i32
    %c0_i32_0 = arith.constant 0 : i32
    %c0_i32_1 = arith.constant 0 : i32
    return %c0_i32, %c0_i32_0 : i32, i32
  }
  func.func @transform_2(%arg0: i32) -> (i32, i32) {
    %c0_i32 = arith.constant 0 : i32
    %c0_i32_0 = arith.constant 0 : i32
    %c0_i32_1 = arith.constant 0 : i32
    return %c0_i32, %c0_i32_0 : i32, i32
  }
  func.func @transform_3(%arg0: i32) -> (i32, i32) {
    %c0_i32 = arith.constant 0 : i32
    %c0_i32_0 = arith.constant 0 : i32
    return %arg0, %c0_i32 : i32, i32
  }
}

module attributes {stable_mosaic.version = 11 : i64} {
  func.func @gemm_bias_relu_kernel(%arg0: i32, %arg1: memref<8x576xbf16, #tpu.memory_space<vmem>>, %arg2: memref<576x128xbf16, #tpu.memory_space<vmem>>, %arg3: memref<1x128xf32, #tpu.memory_space<vmem>>, %arg4: memref<8x128xf32, #tpu.memory_space<vmem>>) attributes {dimension_semantics = [#tpu.dimension_semantics<parallel>], iteration_bounds = array<i64: 1>, scalar_prefetch = 0 : i64, scratch_operands = 0 : i64, tpu.core_type = #tpu.core_type<tc>, window_params = [{transform_indices = @transform_0, window_bounds = array<i64: 8, 576>}, {pipeline_mode = #tpu.pipeline_mode<synchronous>, transform_indices = @transform_1, window_bounds = array<i64: 576, 128>}, {pipeline_mode = #tpu.pipeline_mode<synchronous>, transform_indices = @transform_2, window_bounds = array<i64: 1, 128>}, {transform_indices = @transform_3, window_bounds = array<i64: 8, 128>}]} {
    %c0 = arith.constant 0 : index
    %c0_0 = arith.constant 0 : index
    %0 = vector.load %arg1[%c0, %c0_0] : memref<8x576xbf16, #tpu.memory_space<vmem>>, vector<8x576xbf16>
    %c0_1 = arith.constant 0 : index
    %c0_2 = arith.constant 0 : index
    %1 = vector.load %arg2[%c0_1, %c0_2] : memref<576x128xbf16, #tpu.memory_space<vmem>>, vector<576x128xbf16>
    %cst = arith.constant dense<0.000000e+00> : vector<8x128xf32>
    %2 = tpu.matmul %0, %1, %cst {dimension_numbers = #tpu.dot_dimension_numbers<[1], [0], [0], [1], [0, 0, 1, 1], [], []>} : vector<8x576xbf16>, vector<576x128xbf16>, vector<8x128xf32> -> vector<8x128xf32>
    %c0_3 = arith.constant 0 : index
    %c0_4 = arith.constant 0 : index
    %3 = vector.load %arg3[%c0_3, %c0_4] : memref<1x128xf32, #tpu.memory_space<vmem>>, vector<1x128xf32>
    %4 = vector.broadcast %3 : vector<1x128xf32> to vector<8x128xf32>
    %5 = arith.addf %2, %4 : vector<8x128xf32>
    %cst_5 = arith.constant 0.000000e+00 : f32
    %6 = vector.broadcast %cst_5 : f32 to vector<8x128xf32>
    %7 = arith.maximumf %5, %6 : vector<8x128xf32>
    %c0_6 = arith.constant 0 : index
    %c0_7 = arith.constant 0 : index
    %8 = vector.load %arg4[%c0_6, %c0_7] : memref<8x128xf32, #tpu.memory_space<vmem>>, vector<8x128xf32>
    tpu.vector_store %arg4[%c0_6, %c0_7], %7 {strides = array<i32>} : memref<8x128xf32, #tpu.memory_space<vmem>>, vector<8x128xf32>,
    return
  }
  func.func @transform_0(%arg0: i32) -> (i32, i32) {
    %c0_i32 = arith.constant 0 : i32
    %c0_i32_0 = arith.constant 0 : i32
    return %arg0, %c0_i32 : i32, i32
  }
  func.func @transform_1(%arg0: i32) -> (i32, i32) {
    %c0_i32 = arith.constant 0 : i32
    %c0_i32_0 = arith.constant 0 : i32
    %c0_i32_1 = arith.constant 0 : i32
    return %c0_i32, %c0_i32_0 : i32, i32
  }
  func.func @transform_2(%arg0: i32) -> (i32, i32) {
    %c0_i32 = arith.constant 0 : i32
    %c0_i32_0 = arith.constant 0 : i32
    %c0_i32_1 = arith.constant 0 : i32
    return %c0_i32, %c0_i32_0 : i32, i32
  }
  func.func @transform_3(%arg0: i32) -> (i32, i32) {
    %c0_i32 = arith.constant 0 : i32
    %c0_i32_0 = arith.constant 0 : i32
    return %arg0, %c0_i32 : i32, i32
  }
}

module attributes {stable_mosaic.version = 11 : i64} {
  func.func @dueling_head_kernel(%arg0: memref<2x64xf32, #tpu.memory_space<vmem>>, %arg1: memref<64x512xbf16, #tpu.memory_space<vmem>>, %arg2: memref<1x512xf32, #tpu.memory_space<vmem>>, %arg3: memref<512x128xbf16, #tpu.memory_space<vmem>>, %arg4: memref<1x128xf32, #tpu.memory_space<vmem>>, %arg5: memref<2x128xf32, #tpu.memory_space<vmem>>) attributes {dimension_semantics = [], scalar_prefetch = 0 : i64, scratch_operands = 0 : i64, tpu.core_type = #tpu.core_type<tc>} {
    %c0 = arith.constant 0 : index
    %c0_0 = arith.constant 0 : index
    %0 = vector.load %arg0[%c0, %c0_0] : memref<2x64xf32, #tpu.memory_space<vmem>>, vector<2x64xf32>
    %1 = arith.truncf %0 : vector<2x64xf32> to vector<2x64xbf16>
    %c0_1 = arith.constant 0 : index
    %c0_2 = arith.constant 0 : index
    %2 = vector.load %arg1[%c0_1, %c0_2] : memref<64x512xbf16, #tpu.memory_space<vmem>>, vector<64x512xbf16>
    %cst = arith.constant dense<0.000000e+00> : vector<2x512xf32>
    %3 = tpu.matmul %1, %2, %cst {dimension_numbers = #tpu.dot_dimension_numbers<[1], [0], [0], [1], [0, 0, 1, 1], [], []>} : vector<2x64xbf16>, vector<64x512xbf16>, vector<2x512xf32> -> vector<2x512xf32>
    %c0_3 = arith.constant 0 : index
    %c0_4 = arith.constant 0 : index
    %4 = vector.load %arg2[%c0_3, %c0_4] : memref<1x512xf32, #tpu.memory_space<vmem>>, vector<1x512xf32>
    %5 = vector.broadcast %4 : vector<1x512xf32> to vector<2x512xf32>
    %6 = arith.addf %3, %5 : vector<2x512xf32>
    %cst_5 = arith.constant 0.000000e+00 : f32
    %7 = vector.broadcast %cst_5 : f32 to vector<2x512xf32>
    %8 = arith.maximumf %6, %7 : vector<2x512xf32>
    %9 = arith.truncf %8 : vector<2x512xf32> to vector<2x512xbf16>
    %c0_6 = arith.constant 0 : index
    %c0_7 = arith.constant 0 : index
    %10 = vector.load %arg3[%c0_6, %c0_7] : memref<512x128xbf16, #tpu.memory_space<vmem>>, vector<512x128xbf16>
    %cst_8 = arith.constant dense<0.000000e+00> : vector<2x128xf32>
    %11 = tpu.matmul %9, %10, %cst_8 {dimension_numbers = #tpu.dot_dimension_numbers<[1], [0], [0], [1], [0, 0, 1, 1], [], []>} : vector<2x512xbf16>, vector<512x128xbf16>, vector<2x128xf32> -> vector<2x128xf32>
    %c0_9 = arith.constant 0 : index
    %c0_10 = arith.constant 0 : index
    %12 = vector.load %arg4[%c0_9, %c0_10] : memref<1x128xf32, #tpu.memory_space<vmem>>, vector<1x128xf32>
    %13 = vector.broadcast %12 : vector<1x128xf32> to vector<2x128xf32>
    %14 = arith.addf %11, %13 : vector<2x128xf32>
    %15 = vector.extract_strided_slice %14 {offsets = [0, 0], sizes = [2, 1], strides = [1, 1]} : vector<2x128xf32> to vector<2x1xf32>
    %cst_11 = arith.constant dense<0.000000e+00> : vector<2xf32>
    %16 = vector.multi_reduction <add>, %14, %cst_11 [1] : vector<2x128xf32> to vector<2xf32>
    %17 = vector.shape_cast %16 : vector<2xf32> to vector<2x1xf32>
    %18 = arith.subf %17, %15 : vector<2x1xf32>
    %cst_12 = arith.constant 0.166666672 : f32
    %19 = vector.broadcast %cst_12 : f32 to vector<2x1xf32>
    %20 = arith.mulf %18, %19 : vector<2x1xf32>
    %21 = vector.broadcast %15 : vector<2x1xf32> to vector<2x128xf32>
    %22 = arith.addf %21, %14 : vector<2x128xf32>
    %23 = vector.broadcast %20 : vector<2x1xf32> to vector<2x128xf32>
    %24 = arith.subf %22, %23 : vector<2x128xf32>
    %c0_13 = arith.constant 0 : index
    %c0_14 = arith.constant 0 : index
    %25 = vector.load %arg5[%c0_13, %c0_14] : memref<2x128xf32, #tpu.memory_space<vmem>>, vector<2x128xf32>
    tpu.vector_store %arg5[%c0_13, %c0_14], %24 {strides = array<i32>} : memref<2x128xf32, #tpu.memory_space<vmem>>, vector<2x128xf32>,
    return
  }
}

</mosaic_0001>

<llo_original>
// kernel: dueling_q_network.4
$region0: #{dueling_q_network.4}
  #allocation0 [shape = 'u32[]', space=smem, size = 0x4, offset = 0x4, fixed_abs, tag = 'smem constant byte address 0x4 - core index']
  #allocation1 [shape = 'u32[72,128]{1,0:T(1,128)}', space=vmem, size = 0x9000, scoped, tag = 'internal scratch']
  %s0 = inlined_call_operand.vmem [shape: bf16[128,256], index: 0, kind: input, shape index: {}]
  %s1 = inlined_call_operand.vmem [shape: bf16[256,128], index: 1, kind: input, shape index: {}]
  %s2 = inlined_call_operand.vmem [shape: f32[1,128], index: 2, kind: input, shape index: {}]
  %s3 = inlined_call_operand.vmem [shape: f32[128,128], index: 3, kind: output, shape index: {}]
  %s4 = sld [smem:[#allocation0]]
  $region22: #{dueling_q_network.4} parent=0
    _
  %s6 = ssub.s32 1, %s4
  %s7 = scalar_select 0, %s6, %s4
  // Predicated region
  $region2: #{dueling_q_network.4} parent=0 // pred_check
    _
  $region3: #{dueling_q_network.4} parent=0 // pred_check_branch
    %9 = sbr.rel (0) target = $region5
  $region4: #{dueling_q_network.4} parent=0 // pred_region
    _
  $region5: #{dueling_q_network.4} parent=0 // pred_fallthru
    _
  // Predicated region
  $region6: #{dueling_q_network.4} parent=0 // pred_check
    _
  $region7: #{dueling_q_network.4} parent=0 // pred_check_branch
    %11 = sbr.rel (0) target = $region9
  $region8: #{dueling_q_network.4} parent=0 // pred_region
    _
  $region9: #{dueling_q_network.4} parent=0 // pred_fallthru
    _
  // Predicated region
  $region10: #{dueling_q_network.4} parent=0 // pred_check
    _
  $region11: #{dueling_q_network.4} parent=0 // pred_check_branch
    %13 = sbr.rel (0) target = $region13
  $region12: #{dueling_q_network.4} parent=0 // pred_region
    _
  $region13: #{dueling_q_network.4} parent=0 // pred_fallthru
    _
  %v14 = vld [vmem:[%s0] sm:$0xff]
  %v15 = vld [vmem:[%s0 + $0x8] sm:$0xff]
  %v16 = vld [vmem:[%s0 + $0x10] sm:$0xff]
  %v17 = vld [vmem:[%s0 + $0x18] sm:$0xff]
  %v18 = vld [vmem:[%s0 + $0x20] sm:$0xff]
  %v19 = vld [vmem:[%s0 + $0x28] sm:$0xff]
  %v20 = vld [vmem:[%s0 + $0x30] sm:$0xff]
  %v21 = vld [vmem:[%s0 + $0x38] sm:$0xff]
  %v22 = vld [vmem:[%s0 + $0x40] sm:$0xff]
  %v23 = vld [vmem:[%s0 + $0x48] sm:$0xff]
  %v24 = vld [vmem:[%s0 + $0x50] sm:$0xff]
  %v25 = vld [vmem:[%s0 + $0x58] sm:$0xff]
  %v26 = vld [vmem:[%s0 + $0x60] sm:$0xff]
  %v27 = vld [vmem:[%s0 + $0x68] sm:$0xff]
  %v28 = vld [vmem:[%s0 + $0x70] sm:$0xff]
  %v29 = vld [vmem:[%s0 + $0x78] sm:$0xff]
  %v30 = vld [vmem:[%s1] sm:$0xf]
  %v31 = vld [vmem:[%s1 + $0x4] sm:$0xf]
  %v32 = vld [vmem:[%s1 + $0x8] sm:$0xf]
  %v33 = vld [vmem:[%s1 + $0xc] sm:$0xf]
  %v34 = vld [vmem:[%s1 + $0x10] sm:$0xf]
  %v35 = vld [vmem:[%s1 + $0x14] sm:$0xf]
  %v36 = vld [vmem:[%s1 + $0x18] sm:$0xf]
  %v37 = vld [vmem:[%s1 + $0x1c] sm:$0xf]
  %v38 = vld [vmem:[%s1 + $0x20] sm:$0xf]
  %v39 = vld [vmem:[%s1 + $0x24] sm:$0xf]
  %v40 = vld [vmem:[%s1 + $0x28] sm:$0xf]
  %v41 = vld [vmem:[%s1 + $0x2c] sm:$0xf]
  %v42 = vld [vmem:[%s1 + $0x30] sm:$0xf]
  %v43 = vld [vmem:[%s1 + $0x34] sm:$0xf]
  %v44 = vld [vmem:[%s1 + $0x38] sm:$0xf]
  %v45 = vld [vmem:[%s1 + $0x3c] sm:$0xf]
  %v46 = vld [vmem:[%s1 + $0x40] sm:$0xf]
  %v47 = vld [vmem:[%s1 + $0x44] sm:$0xf]
  %v48 = vld [vmem:[%s1 + $0x48] sm:$0xf]
  %v49 = vld [vmem:[%s1 + $0x4c] sm:$0xf]
  %v50 = vld [vmem:[%s1 + $0x50] sm:$0xf]
  %v51 = vld [vmem:[%s1 + $0x54] sm:$0xf]
  %v52 = vld [vmem:[%s1 + $0x58] sm:$0xf]
  %v53 = vld [vmem:[%s1 + $0x5c] sm:$0xf]
  %v54 = vld [vmem:[%s1 + $0x60] sm:$0xf]
  %v55 = vld [vmem:[%s1 + $0x64] sm:$0xf]
  %v56 = vld [vmem:[%s1 + $0x68] sm:$0xf]
  %v57 = vld [vmem:[%s1 + $0x6c] sm:$0xf]
  %v58 = vld [vmem:[%s1 + $0x70] sm:$0xf]
  %v59 = vld [vmem:[%s1 + $0x74] sm:$0xf]
  %v60 = vld [vmem:[%s1 + $0x78] sm:$0xf]
  %v61 = vld [vmem:[%s1 + $0x7c] sm:$0xf]
  %v62 = vld [vmem:[%s2] sm:$0x1]
  %v64 = vperm.slane %v62, 0
  %v82 = vunpack.c.l.b16 %v14
  %v83 = vunpack.c.h.b16 %v14
  %v84 = vunpack.c.l.b16 %v15
  %v85 = vunpack.c.h.b16 %v15
  %v86 = vunpack.c.l.b16 %v16
  %v87 = vunpack.c.h.b16 %v16
  %v88 = vunpack.c.l.b16 %v17
  %v89 = vunpack.c.h.b16 %v17
  %v90 = vunpack.c.l.b16 %v18
  %v91 = vunpack.c.h.b16 %v18
  %v92 = vunpack.c.l.b16 %v19
  %v93 = vunpack.c.h.b16 %v19
  %v94 = vunpack.c.l.b16 %v20
  %v95 = vunpack.c.h.b16 %v20
  %v96 = vunpack.c.l.b16 %v21
  %v97 = vunpack.c.h.b16 %v21
  %v98 = vunpack.c.l.b16 %v22
  %v99 = vunpack.c.h.b16 %v22
  %v100 = vunpack.c.l.b16 %v23
  %v101 = vunpack.c.h.b16 %v23
  %v102 = vunpack.c.l.b16 %v24
  %v103 = vunpack.c.h.b16 %v24
  %v104 = vunpack.c.l.b16 %v25
  %v105 = vunpack.c.h.b16 %v25
  %v106 = vunpack.c.l.b16 %v26
  %v107 = vunpack.c.h.b16 %v26
  %v108 = vunpack.c.l.b16 %v27
  %v109 = vunpack.c.h.b16 %v27
  %v110 = vunpack.c.l.b16 %v28
  %v111 = vunpack.c.h.b16 %v28
  %v112 = vunpack.c.l.b16 %v29
  %v113 = vunpack.c.h.b16 %v29
  %v114 = vpack.c.b16 %v84, %v82
  %v115 = vpack.c.b16 %v85, %v83
  %v116 = vpack.c.b16 %v88, %v86
  %v117 = vpack.c.b16 %v89, %v87
  %v118 = vpack.c.b16 %v92, %v90
  %v119 = vpack.c.b16 %v93, %v91
  %v120 = vpack.c.b16 %v96, %v94
  %v121 = vpack.c.b16 %v97, %v95
  %v122 = vpack.c.b16 %v100, %v98
  %v123 = vpack.c.b16 %v101, %v99
  %v124 = vpack.c.b16 %v104, %v102
  %v125 = vpack.c.b16 %v105, %v103
  %v126 = vpack.c.b16 %v108, %v106
  %v127 = vpack.c.b16 %v109, %v107
  %v128 = vpack.c.b16 %v112, %v110
  %v129 = vpack.c.b16 %v113, %v111
  %v178 = vunpack.c.l.b16 %v30
  %v179 = vunpack.c.l.b16 %v31
  %v180 = vunpack.c.l.b16 %v32
  %v181 = vunpack.c.l.b16 %v33
  %v182 = vunpack.c.l.b16 %v34
  %v183 = vunpack.c.l.b16 %v35
  %v184 = vunpack.c.l.b16 %v36
  %v185 = vunpack.c.l.b16 %v37
  %v186 = vunpack.c.l.b16 %v38
  %v187 = vunpack.c.l.b16 %v39
  %v188 = vunpack.c.l.b16 %v40
  %v189 = vunpack.c.l.b16 %v41
  %v190 = vunpack.c.l.b16 %v42
  %v191 = vunpack.c.l.b16 %v43
  %v192 = vunpack.c.l.b16 %v44
  %v193 = vunpack.c.l.b16 %v45
  %v194 = vunpack.c.l.b16 %v46
  %v195 = vunpack.c.l.b16 %v47
  %v196 = vunpack.c.l.b16 %v48
  %v197 = vunpack.c.l.b16 %v49
  %v198 = vunpack.c.l.b16 %v50
  %v199 = vunpack.c.l.b16 %v51
  %v200 = vunpack.c.l.b16 %v52
  %v201 = vunpack.c.l.b16 %v53
  %v202 = vunpack.c.l.b16 %v54
  %v203 = vunpack.c.l.b16 %v55
  %v204 = vunpack.c.l.b16 %v56
  %v205 = vunpack.c.l.b16 %v57
  %v206 = vunpack.c.l.b16 %v58
  %v207 = vunpack.c.l.b16 %v59
  %v208 = vunpack.c.l.b16 %v60
  %v209 = vunpack.c.l.b16 %v61
  %v210 = vpack.c.b16 %v179, %v178
  %v211 = vpack.c.b16 %v181, %v180
  %v212 = vpack.c.b16 %v183, %v182
  %v213 = vpack.c.b16 %v185, %v184
  %v214 = vpack.c.b16 %v187, %v186
  %v215 = vpack.c.b16 %v189, %v188
  %v216 = vpack.c.b16 %v191, %v190
  %v217 = vpack.c.b16 %v193, %v192
  %v218 = vpack.c.b16 %v195, %v194
  %v219 = vpack.c.b16 %v197, %v196
  %v220 = vpack.c.b16 %v199, %v198
  %v221 = vpack.c.b16 %v201, %v200
  %v222 = vpack.c.b16 %v203, %v202
  %v223 = vpack.c.b16 %v205, %v204
  %v224 = vpack.c.b16 %v207, %v206
  %v225 = vpack.c.b16 %v209, %v208
  %242 = vmatpush.bf16.msra.mxu0 %v217
  %243 = vmatpush.bf16.msra.mxu0 %v216
  %244 = vmatpush.bf16.msra.mxu0 %v215
  %245 = vmatpush.bf16.msra.mxu0 %v214
  %246 = vmatpush.bf16.msra.mxu0 %v213
  %247 = vmatpush.bf16.msra.mxu0 %v212
  %248 = vmatpush.bf16.msra.mxu0 %v211
  %249 = vmatpush.bf16.msra.mxu0 %v210
  %250 = vmatmul.bf16.gmra.mxu0 %v114
  %v251 = vpop.f32.mrf.mxu0
  %v252 = vadd.f32 %v64, %v251
  %v253 = vpop.f32.mrf.mxu0
  %v254 = vadd.f32 %v64, %v253
  %255 = vmatmul.bf16.gmra.mxu0 %v116
  %v256 = vpop.f32.mrf.mxu0
  %v257 = vadd.f32 %v64, %v256
  %v258 = vpop.f32.mrf.mxu0
  %v259 = vadd.f32 %v64, %v258
  %260 = vmatmul.bf16.gmra.mxu0 %v118
  %v261 = vpop.f32.mrf.mxu0
  %v262 = vadd.f32 %v64, %v261
  %v263 = vpop.f32.mrf.mxu0
  %v264 = vadd.f32 %v64, %v263
  %265 = vmatmul.bf16.gmra.mxu0 %v120
  %v266 = vpop.f32.mrf.mxu0
  %v267 = vadd.f32 %v64, %v266
  %v268 = vpop.f32.mrf.mxu0
  %v269 = vadd.f32 %v64, %v268
  %270 = vmatmul.bf16.gmra.mxu0 %v122
  %v271 = vpop.f32.mrf.mxu0
  %v272 = vadd.f32 %v64, %v271
  %v273 = vpop.f32.mrf.mxu0
  %v274 = vadd.f32 %v64, %v273
  %275 = vmatmul.bf16.gmra.mxu0 %v124
  %v276 = vpop.f32.mrf.mxu0
  %v277 = vadd.f32 %v64, %v276
  %v278 = vpop.f32.mrf.mxu0
  %v279 = vadd.f32 %v64, %v278
  %280 = vmatmul.bf16.gmra.mxu0 %v126
  %v281 = vpop.f32.mrf.mxu0
  %v282 = vadd.f32 %v64, %v281
  %v283 = vpop.f32.mrf.mxu0
  %v284 = vadd.f32 %v64, %v283
  %285 = vmatmul.bf16.gmra.mxu0 %v128
  %v286 = vpop.f32.mrf.mxu0
  %v287 = vadd.f32 %v64, %v286
  %v288 = vpop.f32.mrf.mxu0
  %v289 = vadd.f32 %v64, %v288
  %290 = vdwg.mxu0
  %291 = vmatpush.bf16.msra.mxu0 %v225
  %292 = vmatpush.bf16.msra.mxu0 %v224
  %293 = vmatpush.bf16.msra.mxu0 %v223
  %294 = vmatpush.bf16.msra.mxu0 %v222
  %295 = vmatpush.bf16.msra.mxu0 %v221
  %296 = vmatpush.bf16.msra.mxu0 %v220
  %297 = vmatpush.bf16.msra.mxu0 %v219
  %298 = vmatpush.bf16.msra.mxu0 %v218
  %299 = vmatmul.bf16.gmra.mxu0 %v115
  %v300 = vpop.f32.mrf.mxu0
  %v301 = vadd.f32 %v252, %v300
  %v302 = vpop.f32.mrf.mxu0
  %v303 = vadd.f32 %v254, %v302
  %304 = vmatmul.bf16.gmra.mxu0 %v117
  %v305 = vpop.f32.mrf.mxu0
  %v306 = vadd.f32 %v257, %v305
  %v307 = vpop.f32.mrf.mxu0
  %v308 = vadd.f32 %v259, %v307
  %309 = vmatmul.bf16.gmra.mxu0 %v119
  %v310 = vpop.f32.mrf.mxu0
  %v311 = vadd.f32 %v262, %v310
  %v312 = vpop.f32.mrf.mxu0
  %v313 = vadd.f32 %v264, %v312
  %314 = vmatmul.bf16.gmra.mxu0 %v121
  %v315 = vpop.f32.mrf.mxu0
  %v316 = vadd.f32 %v267, %v315
  %v317 = vpop.f32.mrf.mxu0
  %v318 = vadd.f32 %v269, %v317
  %319 = vmatmul.bf16.gmra.mxu0 %v123
  %v320 = vpop.f32.mrf.mxu0
  %v321 = vadd.f32 %v272, %v320
  %v322 = vpop.f32.mrf.mxu0
  %v323 = vadd.f32 %v274, %v322
  %324 = vmatmul.bf16.gmra.mxu0 %v125
  %v325 = vpop.f32.mrf.mxu0
  %v326 = vadd.f32 %v277, %v325
  %v327 = vpop.f32.mrf.mxu0
  %v328 = vadd.f32 %v279, %v327
  %329 = vmatmul.bf16.gmra.mxu0 %v127
  %v330 = vpop.f32.mrf.mxu0
  %v331 = vadd.f32 %v282, %v330
  %v332 = vpop.f32.mrf.mxu0
  %v333 = vadd.f32 %v284, %v332
  %334 = vmatmul.bf16.gmra.mxu0 %v129
  %v335 = vpop.f32.mrf.mxu0
  %v336 = vadd.f32 %v287, %v335
  %v337 = vpop.f32.mrf.mxu0
  %v338 = vadd.f32 %v289, %v337
  %339 = vdwg.mxu0
  %v340 = vmax.f32 %v301, 0.0
  %v341 = vmax.f32 %v303, 0.0
  %v342 = vmax.f32 %v306, 0.0
  %v343 = vmax.f32 %v308, 0.0
  %v344 = vmax.f32 %v311, 0.0
  %v345 = vmax.f32 %v313, 0.0
  %v346 = vmax.f32 %v316, 0.0
  %v347 = vmax.f32 %v318, 0.0
  %v348 = vmax.f32 %v321, 0.0
  %v349 = vmax.f32 %v323, 0.0
  %v350 = vmax.f32 %v326, 0.0
  %v351 = vmax.f32 %v328, 0.0
  %v352 = vmax.f32 %v331, 0.0
  %v353 = vmax.f32 %v333, 0.0
  %v354 = vmax.f32 %v336, 0.0
  %v355 = vmax.f32 %v338, 0.0
  %356 = vst [vmem:[%s3] sm:$0xff] %v340
  %357 = vst [vmem:[%s3 + $0x8] sm:$0xff] %v341
  %358 = vst [vmem:[%s3 + $0x10] sm:$0xff] %v342
  %359 = vst [vmem:[%s3 + $0x18] sm:$0xff] %v343
  %360 = vst [vmem:[%s3 + $0x20] sm:$0xff] %v344
  %361 = vst [vmem:[%s3 + $0x28] sm:$0xff] %v345
  %362 = vst [vmem:[%s3 + $0x30] sm:$0xff] %v346
  %363 = vst [vmem:[%s3 + $0x38] sm:$0xff] %v347
  %364 = vst [vmem:[%s3 + $0x40] sm:$0xff] %v348
  %365 = vst [vmem:[%s3 + $0x48] sm:$0xff] %v349
  %366 = vst [vmem:[%s3 + $0x50] sm:$0xff] %v350
  %367 = vst [vmem:[%s3 + $0x58] sm:$0xff] %v351
  %368 = vst [vmem:[%s3 + $0x60] sm:$0xff] %v352
  %369 = vst [vmem:[%s3 + $0x68] sm:$0xff] %v353
  %370 = vst [vmem:[%s3 + $0x70] sm:$0xff] %v354
  %371 = vst [vmem:[%s3 + $0x78] sm:$0xff] %v355
  // Predicated region
  $region14: #{dueling_q_network.4} parent=0 // pred_check
    _
  $region15: #{dueling_q_network.4} parent=0 // pred_check_branch
    %373 = sbr.rel (0) target = $region17
  $region16: #{dueling_q_network.4} parent=0 // pred_region
    _
  $region17: #{dueling_q_network.4} parent=0 // pred_fallthru
    _
  // Predicated region
  $region18: #{dueling_q_network.4} parent=0 // pred_check
    _
  $region19: #{dueling_q_network.4} parent=0 // pred_check_branch
    %375 = sbr.rel (0) target = $region21
  $region20: #{dueling_q_network.4} parent=0 // pred_region
    _
  $region21: #{dueling_q_network.4} parent=0 // pred_fallthru
    _

// kernel: dueling_q_network.5
$region0: #{dueling_q_network.5}
  #allocation0 [shape = 'u32[]', space=smem, size = 0x4, offset = 0x4, fixed_abs, tag = 'smem constant byte address 0x4 - core index']
  #allocation1 [shape = 'u32[72,128]{1,0:T(1,128)}', space=vmem, size = 0x9000, scoped, tag = 'internal scratch']
  %s0 = inlined_call_operand.vmem [shape: bf16[24,512], index: 0, kind: input, shape index: {}]
  %s1 = inlined_call_operand.vmem [shape: bf16[512,128], index: 1, kind: input, shape index: {}]
  %s2 = inlined_call_operand.vmem [shape: f32[1,128], index: 2, kind: input, shape index: {}]
  %s3 = inlined_call_operand.vmem [shape: f32[24,128], index: 3, kind: output, shape index: {}]
  %s4 = sld [smem:[#allocation0]]
  $region22: #{dueling_q_network.5} parent=0
    _
  %s6 = ssub.s32 1, %s4
  %s7 = scalar_select 0, %s6, %s4
  // Predicated region
  $region2: #{dueling_q_network.5} parent=0 // pred_check
    _
  $region3: #{dueling_q_network.5} parent=0 // pred_check_branch
    %9 = sbr.rel (0) target = $region5
  $region4: #{dueling_q_network.5} parent=0 // pred_region
    _
  $region5: #{dueling_q_network.5} parent=0 // pred_fallthru
    _
  // Predicated region
  $region6: #{dueling_q_network.5} parent=0 // pred_check
    _
  $region7: #{dueling_q_network.5} parent=0 // pred_check_branch
    %11 = sbr.rel (0) target = $region9
  $region8: #{dueling_q_network.5} parent=0 // pred_region
    _
  $region9: #{dueling_q_network.5} parent=0 // pred_fallthru
    _
  // Predicated region
  $region10: #{dueling_q_network.5} parent=0 // pred_check
    _
  $region11: #{dueling_q_network.5} parent=0 // pred_check_branch
    %13 = sbr.rel (0) target = $region13
  $region12: #{dueling_q_network.5} parent=0 // pred_region
    _
  $region13: #{dueling_q_network.5} parent=0 // pred_fallthru
    _
  %v14 = vld [vmem:[%s0] sm:$0xff]
  %v15 = vld [vmem:[%s0 + $0x8] sm:$0xff]
  %v16 = vld [vmem:[%s0 + $0x10] sm:$0xff]
  %v17 = vld [vmem:[%s0 + $0x18] sm:$0xff]
  %v18 = vld [vmem:[%s0 + $0x20] sm:$0xff]
  %v19 = vld [vmem:[%s0 + $0x28] sm:$0xff]
  %v20 = vld [vmem:[%s1] sm:$0xf]
  %v21 = vld [vmem:[%s1 + $0x4] sm:$0xf]
  %v22 = vld [vmem:[%s1 + $0x8] sm:$0xf]
  %v23 = vld [vmem:[%s1 + $0xc] sm:$0xf]
  %v24 = vld [vmem:[%s1 + $0x10] sm:$0xf]
  %v25 = vld [vmem:[%s1 + $0x14] sm:$0xf]
  %v26 = vld [vmem:[%s1 + $0x18] sm:$0xf]
  %v27 = vld [vmem:[%s1 + $0x1c] sm:$0xf]
  %v28 = vld [vmem:[%s1 + $0x20] sm:$0xf]
  %v29 = vld [vmem:[%s1 + $0x24] sm:$0xf]
  %v30 = vld [vmem:[%s1 + $0x28] sm:$0xf]
  %v31 = vld [vmem:[%s1 + $0x2c] sm:$0xf]
  %v32 = vld [vmem:[%s1 + $0x30] sm:$0xf]
  %v33 = vld [vmem:[%s1 + $0x34] sm:$0xf]
  %v34 = vld [vmem:[%s1 + $0x38] sm:$0xf]
  %v35 = vld [vmem:[%s1 + $0x3c] sm:$0xf]
  %v36 = vld [vmem:[%s1 + $0x40] sm:$0xf]
  %v37 = vld [vmem:[%s1 + $0x44] sm:$0xf]
  %v38 = vld [vmem:[%s1 + $0x48] sm:$0xf]
  %v39 = vld [vmem:[%s1 + $0x4c] sm:$0xf]
  %v40 = vld [vmem:[%s1 + $0x50] sm:$0xf]
  %v41 = vld [vmem:[%s1 + $0x54] sm:$0xf]
  %v42 = vld [vmem:[%s1 + $0x58] sm:$0xf]
  %v43 = vld [vmem:[%s1 + $0x5c] sm:$0xf]
  %v44 = vld [vmem:[%s1 + $0x60] sm:$0xf]
  %v45 = vld [vmem:[%s1 + $0x64] sm:$0xf]
  %v46 = vld [vmem:[%s1 + $0x68] sm:$0xf]
  %v47 = vld [vmem:[%s1 + $0x6c] sm:$0xf]
  %v48 = vld [vmem:[%s1 + $0x70] sm:$0xf]
  %v49 = vld [vmem:[%s1 + $0x74] sm:$0xf]
  %v50 = vld [vmem:[%s1 + $0x78] sm:$0xf]
  %v51 = vld [vmem:[%s1 + $0x7c] sm:$0xf]
  %v52 = vld [vmem:[%s1 + $0x80] sm:$0xf]
  %v53 = vld [vmem:[%s1 + $0x84] sm:$0xf]
  %v54 = vld [vmem:[%s1 + $0x88] sm:$0xf]
  %v55 = vld [vmem:[%s1 + $0x8c] sm:$0xf]
  %v56 = vld [vmem:[%s1 + $0x90] sm:$0xf]
  %v57 = vld [vmem:[%s1 + $0x94] sm:$0xf]
  %v58 = vld [vmem:[%s1 + $0x98] sm:$0xf]
  %v59 = vld [vmem:[%s1 + $0x9c] sm:$0xf]
  %v60 = vld [vmem:[%s1 + $0xa0] sm:$0xf]
  %v61 = vld [vmem:[%s1 + $0xa4] sm:$0xf]
  %v62 = vld [vmem:[%s1 + $0xa8] sm:$0xf]
  %v63 = vld [vmem:[%s1 + $0xac] sm:$0xf]
  %v64 = vld [vmem:[%s1 + $0xb0] sm:$0xf]
  %v65 = vld [vmem:[%s1 + $0xb4] sm:$0xf]
  %v66 = vld [vmem:[%s1 + $0xb8] sm:$0xf]
  %v67 = vld [vmem:[%s1 + $0xbc] sm:$0xf]
  %v68 = vld [vmem:[%s1 + $0xc0] sm:$0xf]
  %v69 = vld [vmem:[%s1 + $0xc4] sm:$0xf]
  %v70 = vld [vmem:[%s1 + $0xc8] sm:$0xf]
  %v71 = vld [vmem:[%s1 + $0xcc] sm:$0xf]
  %v72 = vld [vmem:[%s1 + $0xd0] sm:$0xf]
  %v73 = vld [vmem:[%s1 + $0xd4] sm:$0xf]
  %v74 = vld [vmem:[%s1 + $0xd8] sm:$0xf]
  %v75 = vld [vmem:[%s1 + $0xdc] sm:$0xf]
  %v76 = vld [vmem:[%s1 + $0xe0] sm:$0xf]
  %v77 = vld [vmem:[%s1 + $0xe4] sm:$0xf]
  %v78 = vld [vmem:[%s1 + $0xe8] sm:$0xf]
  %v79 = vld [vmem:[%s1 + $0xec] sm:$0xf]
  %v80 = vld [vmem:[%s1 + $0xf0] sm:$0xf]
  %v81 = vld [vmem:[%s1 + $0xf4] sm:$0xf]
  %v82 = vld [vmem:[%s1 + $0xf8] sm:$0xf]
  %v83 = vld [vmem:[%s1 + $0xfc] sm:$0xf]
  %v84 = vld [vmem:[%s2] sm:$0x1]
  %v86 = vperm.slane %v84, 0
  %v94 = vunpack.c.l.b16 %v14
  %v95 = vunpack.c.h.b16 %v14
  %v96 = vunpack.c.l.b16 %v15
  %v97 = vunpack.c.h.b16 %v15
  %v98 = vunpack.c.l.b16 %v16
  %v99 = vunpack.c.h.b16 %v16
  %v100 = vunpack.c.l.b16 %v17
  %v101 = vunpack.c.h.b16 %v17
  %v102 = vunpack.c.l.b16 %v18
  %v103 = vunpack.c.h.b16 %v18
  %v104 = vunpack.c.l.b16 %v19
  %v105 = vunpack.c.h.b16 %v19
  %v106 = vpack.c.b16 %v98, %v94
  %v107 = vpack.c.b16 %v99, %v95
  %v108 = vpack.c.b16 %v100, %v96
  %v109 = vpack.c.b16 %v101, %v97
  %v110 = vpack.c.b16 %v102, %v102
  %v111 = vpack.c.b16 %v103, %v103
  %v112 = vpack.c.b16 %v104, %v104
  %v113 = vpack.c.b16 %v105, %v105
  %v186 = vunpack.c.l.b16 %v20
  %v187 = vunpack.c.l.b16 %v21
  %v188 = vunpack.c.l.b16 %v22
  %v189 = vunpack.c.l.b16 %v23
  %v190 = vunpack.c.l.b16 %v24
  %v191 = vunpack.c.l.b16 %v25
  %v192 = vunpack.c.l.b16 %v26
  %v193 = vunpack.c.l.b16 %v27
  %v194 = vunpack.c.l.b16 %v28
  %v195 = vunpack.c.l.b16 %v29
  %v196 = vunpack.c.l.b16 %v30
  %v197 = vunpack.c.l.b16 %v31
  %v198 = vunpack.c.l.b16 %v32
  %v199 = vunpack.c.l.b16 %v33
  %v200 = vunpack.c.l.b16 %v34
  %v201 = vunpack.c.l.b16 %v35
  %v202 = vunpack.c.l.b16 %v36
  %v203 = vunpack.c.l.b16 %v37
  %v204 = vunpack.c.l.b16 %v38
  %v205 = vunpack.c.l.b16 %v39
  %v206 = vunpack.c.l.b16 %v40
  %v207 = vunpack.c.l.b16 %v41
  %v208 = vunpack.c.l.b16 %v42
  %v209 = vunpack.c.l.b16 %v43
  %v210 = vunpack.c.l.b16 %v44
  %v211 = vunpack.c.l.b16 %v45
  %v212 = vunpack.c.l.b16 %v46
  %v213 = vunpack.c.l.b16 %v47
  %v214 = vunpack.c.l.b16 %v48
  %v215 = vunpack.c.l.b16 %v49
  %v216 = vunpack.c.l.b16 %v50
  %v217 = vunpack.c.l.b16 %v51
  %v218 = vunpack.c.l.b16 %v52
  %v219 = vunpack.c.l.b16 %v53
  %v220 = vunpack.c.l.b16 %v54
  %v221 = vunpack.c.l.b16 %v55
  %v222 = vunpack.c.l.b16 %v56
  %v223 = vunpack.c.l.b16 %v57
  %v224 = vunpack.c.l.b16 %v58
  %v225 = vunpack.c.l.b16 %v59
  %v226 = vunpack.c.l.b16 %v60
  %v227 = vunpack.c.l.b16 %v61
  %v228 = vunpack.c.l.b16 %v62
  %v229 = vunpack.c.l.b16 %v63
  %v230 = vunpack.c.l.b16 %v64
  %v231 = vunpack.c.l.b16 %v65
  %v232 = vunpack.c.l.b16 %v66
  %v233 = vunpack.c.l.b16 %v67
  %v234 = vunpack.c.l.b16 %v68
  %v235 = vunpack.c.l.b16 %v69
  %v236 = vunpack.c.l.b16 %v70
  %v237 = vunpack.c.l.b16 %v71
  %v238 = vunpack.c.l.b16 %v72
  %v239 = vunpack.c.l.b16 %v73
  %v240 = vunpack.c.l.b16 %v74
  %v241 = vunpack.c.l.b16 %v75
  %v242 = vunpack.c.l.b16 %v76
  %v243 = vunpack.c.l.b16 %v77
  %v244 = vunpack.c.l.b16 %v78
  %v245 = vunpack.c.l.b16 %v79
  %v246 = vunpack.c.l.b16 %v80
  %v247 = vunpack.c.l.b16 %v81
  %v248 = vunpack.c.l.b16 %v82
  %v249 = vunpack.c.l.b16 %v83
  %v250 = vpack.c.b16 %v187, %v186
  %v251 = vpack.c.b16 %v189, %v188
  %v252 = vpack.c.b16 %v191, %v190
  %v253 = vpack.c.b16 %v193, %v192
  %v254 = vpack.c.b16 %v195, %v194
  %v255 = vpack.c.b16 %v197, %v196
  %v256 = vpack.c.b16 %v199, %v198
  %v257 = vpack.c.b16 %v201, %v200
  %v258 = vpack.c.b16 %v203, %v202
  %v259 = vpack.c.b16 %v205, %v204
  %v260 = vpack.c.b16 %v207, %v206
  %v261 = vpack.c.b16 %v209, %v208
  %v262 = vpack.c.b16 %v211, %v210
  %v263 = vpack.c.b16 %v213, %v212
  %v264 = vpack.c.b16 %v215, %v214
  %v265 = vpack.c.b16 %v217, %v216
  %v266 = vpack.c.b16 %v219, %v218
  %v267 = vpack.c.b16 %v221, %v220
  %v268 = vpack.c.b16 %v223, %v222
  %v269 = vpack.c.b16 %v225, %v224
  %v270 = vpack.c.b16 %v227, %v226
  %v271 = vpack.c.b16 %v229, %v228
  %v272 = vpack.c.b16 %v231, %v230
  %v273 = vpack.c.b16 %v233, %v232
  %v274 = vpack.c.b16 %v235, %v234
  %v275 = vpack.c.b16 %v237, %v236
  %v276 = vpack.c.b16 %v239, %v238
  %v277 = vpack.c.b16 %v241, %v240
  %v278 = vpack.c.b16 %v243, %v242
  %v279 = vpack.c.b16 %v245, %v244
  %v280 = vpack.c.b16 %v247, %v246
  %v281 = vpack.c.b16 %v249, %v248
  %314 = vmatpush.bf16.msra.mxu0 %v257
  %315 = vmatpush.bf16.msra.mxu0 %v256
  %316 = vmatpush.bf16.msra.mxu0 %v255
  %317 = vmatpush.bf16.msra.mxu0 %v254
  %318 = vmatpush.bf16.msra.mxu0 %v253
  %319 = vmatpush.bf16.msra.mxu0 %v252
  %320 = vmatpush.bf16.msra.mxu0 %v251
  %321 = vmatpush.bf16.msra.mxu0 %v250
  %322 = vmatmul.bf16.gmra.mxu0 %v106
  %v323 = vpop.f32.mrf.mxu0
  %v324 = vadd.f32 %v86, %v323
  %v325 = vpop.f32.mrf.mxu0
  %v326 = vadd.f32 %v86, %v325
  %327 = vmatmul.bf16.gmra.mxu0 %v110
  %v328 = vpop.f32.mrf.mxu0
  %v329 = vadd.f32 %v86, %v328
  %v330 = vpop.f32.mrf.mxu0
  %331 = vdwg.mxu0
  %332 = vmatpush.bf16.msra.mxu0 %v265
  %333 = vmatpush.bf16.msra.mxu0 %v264
  %334 = vmatpush.bf16.msra.mxu0 %v263
  %335 = vmatpush.bf16.msra.mxu0 %v262
  %336 = vmatpush.bf16.msra.mxu0 %v261
  %337 = vmatpush.bf16.msra.mxu0 %v260
  %338 = vmatpush.bf16.msra.mxu0 %v259
  %339 = vmatpush.bf16.msra.mxu0 %v258
  %340 = vmatmul.bf16.gmra.mxu0 %v107
  %v341 = vpop.f32.mrf.mxu0
  %v342 = vadd.f32 %v324, %v341
  %v343 = vpop.f32.mrf.mxu0
  %v344 = vadd.f32 %v326, %v343
  %345 = vmatmul.bf16.gmra.mxu0 %v111
  %v346 = vpop.f32.mrf.mxu0
  %v347 = vadd.f32 %v329, %v346
  %v348 = vpop.f32.mrf.mxu0
  %349 = vdwg.mxu0
  %350 = vmatpush.bf16.msra.mxu0 %v273
  %351 = vmatpush.bf16.msra.mxu0 %v272
  %352 = vmatpush.bf16.msra.mxu0 %v271
  %353 = vmatpush.bf16.msra.mxu0 %v270
  %354 = vmatpush.bf16.msra.mxu0 %v269
  %355 = vmatpush.bf16.msra.mxu0 %v268
  %356 = vmatpush.bf16.msra.mxu0 %v267
  %357 = vmatpush.bf16.msra.mxu0 %v266
  %358 = vmatmul.bf16.gmra.mxu0 %v108
  %v359 = vpop.f32.mrf.mxu0
  %v360 = vadd.f32 %v342, %v359
  %v361 = vpop.f32.mrf.mxu0
  %v362 = vadd.f32 %v344, %v361
  %363 = vmatmul.bf16.gmra.mxu0 %v112
  %v364 = vpop.f32.mrf.mxu0
  %v365 = vadd.f32 %v347, %v364
  %v366 = vpop.f32.mrf.mxu0
  %367 = vdwg.mxu0
  %368 = vmatpush.bf16.msra.mxu0 %v281
  %369 = vmatpush.bf16.msra.mxu0 %v280
  %370 = vmatpush.bf16.msra.mxu0 %v279
  %371 = vmatpush.bf16.msra.mxu0 %v278
  %372 = vmatpush.bf16.msra.mxu0 %v277
  %373 = vmatpush.bf16.msra.mxu0 %v276
  %374 = vmatpush.bf16.msra.mxu0 %v275
  %375 = vmatpush.bf16.msra.mxu0 %v274
  %376 = vmatmul.bf16.gmra.mxu0 %v109
  %v377 = vpop.f32.mrf.mxu0
  %v378 = vadd.f32 %v360, %v377
  %v379 = vpop.f32.mrf.mxu0
  %v380 = vadd.f32 %v362, %v379
  %381 = vmatmul.bf16.gmra.mxu0 %v113
  %v382 = vpop.f32.mrf.mxu0
  %v383 = vadd.f32 %v365, %v382
  %v384 = vpop.f32.mrf.mxu0
  %385 = vdwg.mxu0
  %v386 = vmax.f32 %v378, 0.0
  %v387 = vmax.f32 %v380, 0.0
  %v388 = vmax.f32 %v383, 0.0
  %389 = vst [vmem:[%s3] sm:$0xff] %v386
  %390 = vst [vmem:[%s3 + $0x8] sm:$0xff] %v387
  %391 = vst [vmem:[%s3 + $0x10] sm:$0xff] %v388
  // Predicated region
  $region14: #{dueling_q_network.5} parent=0 // pred_check
    _
  $region15: #{dueling_q_network.5} parent=0 // pred_check_branch
    %393 = sbr.rel (0) target = $region17
  $region16: #{dueling_q_network.5} parent=0 // pred_region
    _
  $region17: #{dueling_q_network.5} parent=0 // pred_fallthru
    _
  // Predicated region
  $region18: #{dueling_q_network.5} parent=0 // pred_check
    _
  $region19: #{dueling_q_network.5} parent=0 // pred_check_branch
    %395 = sbr.rel (0) target = $region21
  $region20: #{dueling_q_network.5} parent=0 // pred_region
    _
  $region21: #{dueling_q_network.5} parent=0 // pred_fallthru
    _

// kernel: dueling_q_network.6
$region0: #{dueling_q_network.6}
  #allocation0 [shape = 'u32[]', space=smem, size = 0x4, offset = 0x4, fixed_abs, tag = 'smem constant byte address 0x4 - core index']
  #allocation1 [shape = 'u32[72,128]{1,0:T(1,128)}', space=vmem, size = 0x9000, scoped, tag = 'internal scratch']
  %s0 = inlined_call_operand.vmem [shape: bf16[8,576], index: 0, kind: input, shape index: {}]
  %s1 = inlined_call_operand.vmem [shape: bf16[576,128], index: 1, kind: input, shape index: {}]
  %s2 = inlined_call_operand.vmem [shape: f32[1,128], index: 2, kind: input, shape index: {}]
  %s3 = inlined_call_operand.vmem [shape: f32[8,128], index: 3, kind: output, shape index: {}]
  %s4 = sld [smem:[#allocation0]]
  $region22: #{dueling_q_network.6} parent=0
    _
  %s6 = ssub.s32 1, %s4
  %s7 = scalar_select 0, %s6, %s4
  // Predicated region
  $region2: #{dueling_q_network.6} parent=0 // pred_check
    _
  $region3: #{dueling_q_network.6} parent=0 // pred_check_branch
    %9 = sbr.rel (0) target = $region5
  $region4: #{dueling_q_network.6} parent=0 // pred_region
    _
  $region5: #{dueling_q_network.6} parent=0 // pred_fallthru
    _
  // Predicated region
  $region6: #{dueling_q_network.6} parent=0 // pred_check
    _
  $region7: #{dueling_q_network.6} parent=0 // pred_check_branch
    %11 = sbr.rel (0) target = $region9
  $region8: #{dueling_q_network.6} parent=0 // pred_region
    _
  $region9: #{dueling_q_network.6} parent=0 // pred_fallthru
    _
  // Predicated region
  $region10: #{dueling_q_network.6} parent=0 // pred_check
    _
  $region11: #{dueling_q_network.6} parent=0 // pred_check_branch
    %13 = sbr.rel (0) target = $region13
  $region12: #{dueling_q_network.6} parent=0 // pred_region
    _
  $region13: #{dueling_q_network.6} parent=0 // pred_fallthru
    _
  %v15 = vld [vmem:[%s0] sm:$0xff]
  %v16 = vld [vmem:[%s0 + $0x8] sm:$0xff]
  %v17 = vld [vmem:[%s0 + $0x10] sm:$0xf]
  %v18 = vld [vmem:[%s1] sm:$0xf]
  %v19 = vld [vmem:[%s1 + $0x4] sm:$0xf]
  %v20 = vld [vmem:[%s1 + $0x8] sm:$0xf]
  %v21 = vld [vmem:[%s1 + $0xc] sm:$0xf]
  %v22 = vld [vmem:[%s1 + $0x10] sm:$0xf]
  %v23 = vld [vmem:[%s1 + $0x14] sm:$0xf]
  %v24 = vld [vmem:[%s1 + $0x18] sm:$0xf]
  %v25 = vld [vmem:[%s1 + $0x1c] sm:$0xf]
  %v26 = vld [vmem:[%s1 + $0x20] sm:$0xf]
  %v27 = vld [vmem:[%s1 + $0x24] sm:$0xf]
  %v28 = vld [vmem:[%s1 + $0x28] sm:$0xf]
  %v29 = vld [vmem:[%s1 + $0x2c] sm:$0xf]
  %v30 = vld [vmem:[%s1 + $0x30] sm:$0xf]
  %v31 = vld [vmem:[%s1 + $0x34] sm:$0xf]
  %v32 = vld [vmem:[%s1 + $0x38] sm:$0xf]
  %v33 = vld [vmem:[%s1 + $0x3c] sm:$0xf]
  %v34 = vld [vmem:[%s1 + $0x40] sm:$0xf]
  %v35 = vld [vmem:[%s1 + $0x44] sm:$0xf]
  %v36 = vld [vmem:[%s1 + $0x48] sm:$0xf]
  %v37 = vld [vmem:[%s1 + $0x4c] sm:$0xf]
  %v38 = vld [vmem:[%s1 + $0x50] sm:$0xf]
  %v39 = vld [vmem:[%s1 + $0x54] sm:$0xf]
  %v40 = vld [vmem:[%s1 + $0x58] sm:$0xf]
  %v41 = vld [vmem:[%s1 + $0x5c] sm:$0xf]
  %v42 = vld [vmem:[%s1 + $0x60] sm:$0xf]
  %v43 = vld [vmem:[%s1 + $0x64] sm:$0xf]
  %v44 = vld [vmem:[%s1 + $0x68] sm:$0xf]
  %v45 = vld [vmem:[%s1 + $0x6c] sm:$0xf]
  %v46 = vld [vmem:[%s1 + $0x70] sm:$0xf]
  %v47 = vld [vmem:[%s1 + $0x74] sm:$0xf]
  %v48 = vld [vmem:[%s1 + $0x78] sm:$0xf]
  %v49 = vld [vmem:[%s1 + $0x7c] sm:$0xf]
  %v50 = vld [vmem:[%s1 + $0x80] sm:$0xf]
  %v51 = vld [vmem:[%s1 + $0x84] sm:$0xf]
  %v52 = vld [vmem:[%s1 + $0x88] sm:$0xf]
  %v53 = vld [vmem:[%s1 + $0x8c] sm:$0xf]
  %v54 = vld [vmem:[%s1 + $0x90] sm:$0xf]
  %v55 = vld [vmem:[%s1 + $0x94] sm:$0xf]
  %v56 = vld [vmem:[%s1 + $0x98] sm:$0xf]
  %v57 = vld [vmem:[%s1 + $0x9c] sm:$0xf]
  %v58 = vld [vmem:[%s1 + $0xa0] sm:$0xf]
  %v59 = vld [vmem:[%s1 + $0xa4] sm:$0xf]
  %v60 = vld [vmem:[%s1 + $0xa8] sm:$0xf]
  %v61 = vld [vmem:[%s1 + $0xac] sm:$0xf]
  %v62 = vld [vmem:[%s1 + $0xb0] sm:$0xf]
  %v63 = vld [vmem:[%s1 + $0xb4] sm:$0xf]
  %v64 = vld [vmem:[%s1 + $0xb8] sm:$0xf]
  %v65 = vld [vmem:[%s1 + $0xbc] sm:$0xf]
  %v66 = vld [vmem:[%s1 + $0xc0] sm:$0xf]
  %v67 = vld [vmem:[%s1 + $0xc4] sm:$0xf]
  %v68 = vld [vmem:[%s1 + $0xc8] sm:$0xf]
  %v69 = vld [vmem:[%s1 + $0xcc] sm:$0xf]
  %v70 = vld [vmem:[%s1 + $0xd0] sm:$0xf]
  %v71 = vld [vmem:[%s1 + $0xd4] sm:$0xf]
  %v72 = vld [vmem:[%s1 + $0xd8] sm:$0xf]
  %v73 = vld [vmem:[%s1 + $0xdc] sm:$0xf]
  %v74 = vld [vmem:[%s1 + $0xe0] sm:$0xf]
  %v75 = vld [vmem:[%s1 + $0xe4] sm:$0xf]
  %v76 = vld [vmem:[%s1 + $0xe8] sm:$0xf]
  %v77 = vld [vmem:[%s1 + $0xec] sm:$0xf]
  %v78 = vld [vmem:[%s1 + $0xf0] sm:$0xf]
  %v79 = vld [vmem:[%s1 + $0xf4] sm:$0xf]
  %v80 = vld [vmem:[%s1 + $0xf8] sm:$0xf]
  %v81 = vld [vmem:[%s1 + $0xfc] sm:$0xf]
  %v82 = vld [vmem:[%s1 + $0x100] sm:$0xf]
  %v83 = vld [vmem:[%s1 + $0x104] sm:$0xf]
  %v84 = vld [vmem:[%s1 + $0x108] sm:$0xf]
  %v85 = vld [vmem:[%s1 + $0x10c] sm:$0xf]
  %v86 = vld [vmem:[%s1 + $0x110] sm:$0xf]
  %v87 = vld [vmem:[%s1 + $0x114] sm:$0xf]
  %v88 = vld [vmem:[%s1 + $0x118] sm:$0xf]
  %v89 = vld [vmem:[%s1 + $0x11c] sm:$0xf]
  %v90 = vld [vmem:[%s2] sm:$0x1]
  %v92 = vperm.slane %v90, 0
  %v97 = vunpack.c.l.b16 %v15
  %v98 = vunpack.c.h.b16 %v15
  %v99 = vunpack.c.l.b16 %v16
  %v100 = vunpack.c.h.b16 %v16
  %v101 = vunpack.c.l.b16 %v17
  %v102 = vpack.c.b16 %v97, %v97
  %v103 = vpack.c.b16 %v98, %v98
  %v104 = vpack.c.b16 %v99, %v99
  %v105 = vpack.c.b16 %v100, %v100
  %v106 = vpack.c.b16 %v101, %v101
  %v183 = vunpack.c.l.b16 %v18
  %v184 = vunpack.c.l.b16 %v19
  %v185 = vunpack.c.l.b16 %v20
  %v186 = vunpack.c.l.b16 %v21
  %v187 = vunpack.c.l.b16 %v22
  %v188 = vunpack.c.l.b16 %v23
  %v189 = vunpack.c.l.b16 %v24
  %v190 = vunpack.c.l.b16 %v25
  %v191 = vunpack.c.l.b16 %v26
  %v192 = vunpack.c.l.b16 %v27
  %v193 = vunpack.c.l.b16 %v28
  %v194 = vunpack.c.l.b16 %v29
  %v195 = vunpack.c.l.b16 %v30
  %v196 = vunpack.c.l.b16 %v31
  %v197 = vunpack.c.l.b16 %v32
  %v198 = vunpack.c.l.b16 %v33
  %v199 = vunpack.c.l.b16 %v34
  %v200 = vunpack.c.l.b16 %v35
  %v201 = vunpack.c.l.b16 %v36
  %v202 = vunpack.c.l.b16 %v37
  %v203 = vunpack.c.l.b16 %v38
  %v204 = vunpack.c.l.b16 %v39
  %v205 = vunpack.c.l.b16 %v40
  %v206 = vunpack.c.l.b16 %v41
  %v207 = vunpack.c.l.b16 %v42
  %v208 = vunpack.c.l.b16 %v43
  %v209 = vunpack.c.l.b16 %v44
  %v210 = vunpack.c.l.b16 %v45
  %v211 = vunpack.c.l.b16 %v46
  %v212 = vunpack.c.l.b16 %v47
  %v213 = vunpack.c.l.b16 %v48
  %v214 = vunpack.c.l.b16 %v49
  %v215 = vunpack.c.l.b16 %v50
  %v216 = vunpack.c.l.b16 %v51
  %v217 = vunpack.c.l.b16 %v52
  %v218 = vunpack.c.l.b16 %v53
  %v219 = vunpack.c.l.b16 %v54
  %v220 = vunpack.c.l.b16 %v55
  %v221 = vunpack.c.l.b16 %v56
  %v222 = vunpack.c.l.b16 %v57
  %v223 = vunpack.c.l.b16 %v58
  %v224 = vunpack.c.l.b16 %v59
  %v225 = vunpack.c.l.b16 %v60
  %v226 = vunpack.c.l.b16 %v61
  %v227 = vunpack.c.l.b16 %v62
  %v228 = vunpack.c.l.b16 %v63
  %v229 = vunpack.c.l.b16 %v64
  %v230 = vunpack.c.l.b16 %v65
  %v231 = vunpack.c.l.b16 %v66
  %v232 = vunpack.c.l.b16 %v67
  %v233 = vunpack.c.l.b16 %v68
  %v234 = vunpack.c.l.b16 %v69
  %v235 = vunpack.c.l.b16 %v70
  %v236 = vunpack.c.l.b16 %v71
  %v237 = vunpack.c.l.b16 %v72
  %v238 = vunpack.c.l.b16 %v73
  %v239 = vunpack.c.l.b16 %v74
  %v240 = vunpack.c.l.b16 %v75
  %v241 = vunpack.c.l.b16 %v76
  %v242 = vunpack.c.l.b16 %v77
  %v243 = vunpack.c.l.b16 %v78
  %v244 = vunpack.c.l.b16 %v79
  %v245 = vunpack.c.l.b16 %v80
  %v246 = vunpack.c.l.b16 %v81
  %v247 = vunpack.c.l.b16 %v82
  %v248 = vunpack.c.l.b16 %v83
  %v249 = vunpack.c.l.b16 %v84
  %v250 = vunpack.c.l.b16 %v85
  %v251 = vunpack.c.l.b16 %v86
  %v252 = vunpack.c.l.b16 %v87
  %v253 = vunpack.c.l.b16 %v88
  %v254 = vunpack.c.l.b16 %v89
  %v255 = vpack.c.b16 %v184, %v183
  %v256 = vpack.c.b16 %v186, %v185
  %v257 = vpack.c.b16 %v188, %v187
  %v258 = vpack.c.b16 %v190, %v189
  %v259 = vpack.c.b16 %v192, %v191
  %v260 = vpack.c.b16 %v194, %v193
  %v261 = vpack.c.b16 %v196, %v195
  %v262 = vpack.c.b16 %v198, %v197
  %v263 = vpack.c.b16 %v200, %v199
  %v264 = vpack.c.b16 %v202, %v201
  %v265 = vpack.c.b16 %v204, %v203
  %v266 = vpack.c.b16 %v206, %v205
  %v267 = vpack.c.b16 %v208, %v207
  %v268 = vpack.c.b16 %v210, %v209
  %v269 = vpack.c.b16 %v212, %v211
  %v270 = vpack.c.b16 %v214, %v213
  %v271 = vpack.c.b16 %v216, %v215
  %v272 = vpack.c.b16 %v218, %v217
  %v273 = vpack.c.b16 %v220, %v219
  %v274 = vpack.c.b16 %v222, %v221
  %v275 = vpack.c.b16 %v224, %v223
  %v276 = vpack.c.b16 %v226, %v225
  %v277 = vpack.c.b16 %v228, %v227
  %v278 = vpack.c.b16 %v230, %v229
  %v279 = vpack.c.b16 %v232, %v231
  %v280 = vpack.c.b16 %v234, %v233
  %v281 = vpack.c.b16 %v236, %v235
  %v282 = vpack.c.b16 %v238, %v237
  %v283 = vpack.c.b16 %v240, %v239
  %v284 = vpack.c.b16 %v242, %v241
  %v285 = vpack.c.b16 %v244, %v243
  %v286 = vpack.c.b16 %v246, %v245
  %v287 = vpack.c.b16 %v248, %v247
  %v288 = vpack.c.b16 %v250, %v249
  %v289 = vpack.c.b16 %v252, %v251
  %v290 = vpack.c.b16 %v254, %v253
  %vm327 = vcmask 523264
  %v329 = vsel %vm327, %v106, 0
  %331 = vmatpush.bf16.msra.mxu0 %v262
  %332 = vmatpush.bf16.msra.mxu0 %v261
  %333 = vmatpush.bf16.msra.mxu0 %v260
  %334 = vmatpush.bf16.msra.mxu0 %v259
  %335 = vmatpush.bf16.msra.mxu0 %v258
  %336 = vmatpush.bf16.msra.mxu0 %v257
  %337 = vmatpush.bf16.msra.mxu0 %v256
  %338 = vmatpush.bf16.msra.mxu0 %v255
  %339 = vmatmul.bf16.gmra.mxu0 %v102
  %v340 = vpop.f32.mrf.mxu0
  %v341 = vadd.f32 %v92, %v340
  %v342 = vpop.f32.mrf.mxu0
  %343 = vdwg.mxu0
  %344 = vmatpush.bf16.msra.mxu0 %v270
  %345 = vmatpush.bf16.msra.mxu0 %v269
  %346 = vmatpush.bf16.msra.mxu0 %v268
  %347 = vmatpush.bf16.msra.mxu0 %v267
  %348 = vmatpush.bf16.msra.mxu0 %v266
  %349 = vmatpush.bf16.msra.mxu0 %v265
  %350 = vmatpush.bf16.msra.mxu0 %v264
  %351 = vmatpush.bf16.msra.mxu0 %v263
  %352 = vmatmul.bf16.gmra.mxu0 %v103
  %v353 = vpop.f32.mrf.mxu0
  %v354 = vadd.f32 %v341, %v353
  %v355 = vpop.f32.mrf.mxu0
  %356 = vdwg.mxu0
  %357 = vmatpush.bf16.msra.mxu0 %v278
  %358 = vmatpush.bf16.msra.mxu0 %v277
  %359 = vmatpush.bf16.msra.mxu0 %v276
  %360 = vmatpush.bf16.msra.mxu0 %v275
  %361 = vmatpush.bf16.msra.mxu0 %v274
  %362 = vmatpush.bf16.msra.mxu0 %v273
  %363 = vmatpush.bf16.msra.mxu0 %v272
  %364 = vmatpush.bf16.msra.mxu0 %v271
  %365 = vmatmul.bf16.gmra.mxu0 %v104
  %v366 = vpop.f32.mrf.mxu0
  %v367 = vadd.f32 %v354, %v366
  %v368 = vpop.f32.mrf.mxu0
  %369 = vdwg.mxu0
  %370 = vmatpush.bf16.msra.mxu0 %v286
  %371 = vmatpush.bf16.msra.mxu0 %v285
  %372 = vmatpush.bf16.msra.mxu0 %v284
  %373 = vmatpush.bf16.msra.mxu0 %v283
  %374 = vmatpush.bf16.msra.mxu0 %v282
  %375 = vmatpush.bf16.msra.mxu0 %v281
  %376 = vmatpush.bf16.msra.mxu0 %v280
  %377 = vmatpush.bf16.msra.mxu0 %v279
  %378 = vmatmul.bf16.gmra.mxu0 %v105
  %v379 = vpop.f32.mrf.mxu0
  %v380 = vadd.f32 %v367, %v379
  %v381 = vpop.f32.mrf.mxu0
  %382 = vdwg.mxu0
  %383 = vmatpush.bf16.msra.mxu0 0
  %384 = vmatpush.bf16.msra.mxu0 0
  %385 = vmatpush.bf16.msra.mxu0 0
  %386 = vmatpush.bf16.msra.mxu0 0
  %387 = vmatpush.bf16.msra.mxu0 %v290
  %388 = vmatpush.bf16.msra.mxu0 %v289
  %389 = vmatpush.bf16.msra.mxu0 %v288
  %390 = vmatpush.bf16.msra.mxu0 %v287
  %391 = vmatmul.bf16.gmra.mxu0 %v329
  %v392 = vpop.f32.mrf.mxu0
  %v393 = vadd.f32 %v380, %v392
  %v394 = vpop.f32.mrf.mxu0
  %395 = vdwg.mxu0
  %v396 = vmax.f32 %v393, 0.0
  %397 = vst [vmem:[%s3] sm:$0xff] %v396
  // Predicated region
  $region14: #{dueling_q_network.6} parent=0 // pred_check
    _
  $region15: #{dueling_q_network.6} parent=0 // pred_check_branch
    %399 = sbr.rel (0) target = $region17
  $region16: #{dueling_q_network.6} parent=0 // pred_region
    _
  $region17: #{dueling_q_network.6} parent=0 // pred_fallthru
    _
  // Predicated region
  $region18: #{dueling_q_network.6} parent=0 // pred_check
    _
  $region19: #{dueling_q_network.6} parent=0 // pred_check_branch
    %401 = sbr.rel (0) target = $region21
  $region20: #{dueling_q_network.6} parent=0 // pred_region
    _
  $region21: #{dueling_q_network.6} parent=0 // pred_fallthru
    _

// kernel: dueling_q_network.7
$region0: #{dueling_q_network.7}
  #allocation0 [shape = 'u32[]', space=smem, size = 0x4, offset = 0x4, fixed_abs, tag = 'smem constant byte address 0x4 - core index']
  #allocation1 [shape = 'u32[72,128]{1,0:T(1,128)}', space=vmem, size = 0x9000, scoped, tag = 'internal scratch']
  %s0 = inlined_call_operand.vmem [shape: f32[2,64], index: 0, kind: input, shape index: {}]
  %s1 = inlined_call_operand.vmem [shape: bf16[64,512], index: 1, kind: input, shape index: {}]
  %s2 = inlined_call_operand.vmem [shape: f32[1,512], index: 2, kind: input, shape index: {}]
  %s3 = inlined_call_operand.vmem [shape: bf16[512,128], index: 3, kind: input, shape index: {}]
  %s4 = inlined_call_operand.vmem [shape: f32[1,128], index: 4, kind: input, shape index: {}]
  %s5 = inlined_call_operand.vmem [shape: f32[2,128], index: 5, kind: output, shape index: {}]
  %s6 = sld [smem:[#allocation0]]
  $region30: #{dueling_q_network.7} parent=0
    _
  %s8 = ssub.s32 1, %s6
  %s9 = scalar_select 0, %s8, %s6
  // Predicated region
  $region2: #{dueling_q_network.7} parent=0 // pred_check
    _
  $region3: #{dueling_q_network.7} parent=0 // pred_check_branch
    %11 = sbr.rel (0) target = $region5
  $region4: #{dueling_q_network.7} parent=0 // pred_region
    _
  $region5: #{dueling_q_network.7} parent=0 // pred_fallthru
    _
  // Predicated region
  $region6: #{dueling_q_network.7} parent=0 // pred_check
    _
  $region7: #{dueling_q_network.7} parent=0 // pred_check_branch
    %13 = sbr.rel (0) target = $region9
  $region8: #{dueling_q_network.7} parent=0 // pred_region
    _
  $region9: #{dueling_q_network.7} parent=0 // pred_fallthru
    _
  // Predicated region
  $region10: #{dueling_q_network.7} parent=0 // pred_check
    _
  $region11: #{dueling_q_network.7} parent=0 // pred_check_branch
    %15 = sbr.rel (0) target = $region13
  $region12: #{dueling_q_network.7} parent=0 // pred_region
    _
  $region13: #{dueling_q_network.7} parent=0 // pred_fallthru
    _
  // Predicated region
  $region14: #{dueling_q_network.7} parent=0 // pred_check
    _
  $region15: #{dueling_q_network.7} parent=0 // pred_check_branch
    %17 = sbr.rel (0) target = $region17
  $region16: #{dueling_q_network.7} parent=0 // pred_region
    _
  $region17: #{dueling_q_network.7} parent=0 // pred_fallthru
    _
  // Predicated region
  $region18: #{dueling_q_network.7} parent=0 // pred_check
    _
  $region19: #{dueling_q_network.7} parent=0 // pred_check_branch
    %19 = sbr.rel (0) target = $region21
  $region20: #{dueling_q_network.7} parent=0 // pred_region
    _
  $region21: #{dueling_q_network.7} parent=0 // pred_fallthru
    _
  %v21 = vld [vmem:[%s0] sm:$0x3]
  %v22 = vpack.c.bf16 %v21, %v21
  %v23 = vld [vmem:[%s1] sm:$0xff]
  %v24 = vld [vmem:[%s1 + $0x8] sm:$0xff]
  %v25 = vld [vmem:[%s1 + $0x10] sm:$0xff]
  %v26 = vld [vmem:[%s1 + $0x18] sm:$0xff]
  %v27 = vld [vmem:[%s1 + $0x20] sm:$0xff]
  %v28 = vld [vmem:[%s1 + $0x28] sm:$0xff]
  %v29 = vld [vmem:[%s1 + $0x30] sm:$0xff]
  %v30 = vld [vmem:[%s1 + $0x38] sm:$0xff]
  %v31 = vld [vmem:[%s1 + $0x40] sm:$0xff]
  %v32 = vld [vmem:[%s1 + $0x48] sm:$0xff]
  %v33 = vld [vmem:[%s1 + $0x50] sm:$0xff]
  %v34 = vld [vmem:[%s1 + $0x58] sm:$0xff]
  %v35 = vld [vmem:[%s1 + $0x60] sm:$0xff]
  %v36 = vld [vmem:[%s1 + $0x68] sm:$0xff]
  %v37 = vld [vmem:[%s1 + $0x70] sm:$0xff]
  %v38 = vld [vmem:[%s1 + $0x78] sm:$0xff]
  %v39 = vld [vmem:[%s2] sm:$0xf]
  %v41 = vperm.slane %v39, 0
  %v42 = vperm.slane %v39, 1
  %v43 = vperm.slane %v39, 2
  %v44 = vperm.slane %v39, 3
  %v65 = vunpack.c.l.b16 %v23
  %v66 = vunpack.c.h.b16 %v23
  %v67 = vunpack.c.l.b16 %v24
  %v68 = vunpack.c.h.b16 %v24
  %v69 = vunpack.c.l.b16 %v25
  %v70 = vunpack.c.h.b16 %v25
  %v71 = vunpack.c.l.b16 %v26
  %v72 = vunpack.c.h.b16 %v26
  %v73 = vunpack.c.l.b16 %v27
  %v74 = vunpack.c.h.b16 %v27
  %v75 = vunpack.c.l.b16 %v28
  %v76 = vunpack.c.h.b16 %v28
  %v77 = vunpack.c.l.b16 %v29
  %v78 = vunpack.c.h.b16 %v29
  %v79 = vunpack.c.l.b16 %v30
  %v80 = vunpack.c.h.b16 %v30
  %v81 = vunpack.c.l.b16 %v31
  %v82 = vunpack.c.h.b16 %v31
  %v83 = vunpack.c.l.b16 %v32
  %v84 = vunpack.c.h.b16 %v32
  %v85 = vunpack.c.l.b16 %v33
  %v86 = vunpack.c.h.b16 %v33
  %v87 = vunpack.c.l.b16 %v34
  %v88 = vunpack.c.h.b16 %v34
  %v89 = vunpack.c.l.b16 %v35
  %v90 = vunpack.c.h.b16 %v35
  %v91 = vunpack.c.l.b16 %v36
  %v92 = vunpack.c.h.b16 %v36
  %v93 = vunpack.c.l.b16 %v37
  %v94 = vunpack.c.h.b16 %v37
  %v95 = vunpack.c.l.b16 %v38
  %v96 = vunpack.c.h.b16 %v38
  %v97 = vpack.c.b16 %v69, %v65
  %v98 = vpack.c.b16 %v70, %v66
  %v99 = vpack.c.b16 %v71, %v67
  %v100 = vpack.c.b16 %v72, %v68
  %v101 = vpack.c.b16 %v77, %v73
  %v102 = vpack.c.b16 %v78, %v74
  %v103 = vpack.c.b16 %v79, %v75
  %v104 = vpack.c.b16 %v80, %v76
  %v105 = vpack.c.b16 %v85, %v81
  %v106 = vpack.c.b16 %v86, %v82
  %v107 = vpack.c.b16 %v87, %v83
  %v108 = vpack.c.b16 %v88, %v84
  %v109 = vpack.c.b16 %v93, %v89
  %v110 = vpack.c.b16 %v94, %v90
  %v111 = vpack.c.b16 %v95, %v91
  %v112 = vpack.c.b16 %v96, %v92
  %vm129 = vcmask 523264
  %v131 = vsel %vm129, %v22, 0
  %133 = vmatpush.bf16.msra.mxu0 0
  %134 = vmatpush.bf16.msra.mxu0 0
  %135 = vmatpush.bf16.msra.mxu0 0
  %136 = vmatpush.bf16.msra.mxu0 0
  %137 = vmatpush.bf16.msra.mxu0 %v109
  %138 = vmatpush.bf16.msra.mxu0 %v105
  %139 = vmatpush.bf16.msra.mxu0 %v101
  %140 = vmatpush.bf16.msra.mxu0 %v97
  %141 = vmatmul.bf16.gmra.mxu0 %v131
  %v142 = vpop.f32.mrf.mxu0
  %v143 = vadd.f32 %v41, %v142
  %v144 = vpop.f32.mrf.mxu0
  %145 = vdwg.mxu0
  %146 = vmatpush.bf16.msra.mxu0 0
  %147 = vmatpush.bf16.msra.mxu0 0
  %148 = vmatpush.bf16.msra.mxu0 0
  %149 = vmatpush.bf16.msra.mxu0 0
  %150 = vmatpush.bf16.msra.mxu0 %v110
  %151 = vmatpush.bf16.msra.mxu0 %v106
  %152 = vmatpush.bf16.msra.mxu0 %v102
  %153 = vmatpush.bf16.msra.mxu0 %v98
  %154 = vmatmul.bf16.gmra.mxu0 %v131
  %v155 = vpop.f32.mrf.mxu0
  %v156 = vadd.f32 %v42, %v155
  %v157 = vpop.f32.mrf.mxu0
  %158 = vdwg.mxu0
  %159 = vmatpush.bf16.msra.mxu0 0
  %160 = vmatpush.bf16.msra.mxu0 0
  %161 = vmatpush.bf16.msra.mxu0 0
  %162 = vmatpush.bf16.msra.mxu0 0
  %163 = vmatpush.bf16.msra.mxu0 %v111
  %164 = vmatpush.bf16.msra.mxu0 %v107
  %165 = vmatpush.bf16.msra.mxu0 %v103
  %166 = vmatpush.bf16.msra.mxu0 %v99
  %167 = vmatmul.bf16.gmra.mxu0 %v131
  %v168 = vpop.f32.mrf.mxu0
  %v169 = vadd.f32 %v43, %v168
  %v170 = vpop.f32.mrf.mxu0
  %171 = vdwg.mxu0
  %172 = vmatpush.bf16.msra.mxu0 0
  %173 = vmatpush.bf16.msra.mxu0 0
  %174 = vmatpush.bf16.msra.mxu0 0
  %175 = vmatpush.bf16.msra.mxu0 0
  %176 = vmatpush.bf16.msra.mxu0 %v112
  %177 = vmatpush.bf16.msra.mxu0 %v108
  %178 = vmatpush.bf16.msra.mxu0 %v104
  %179 = vmatpush.bf16.msra.mxu0 %v100
  %180 = vmatmul.bf16.gmra.mxu0 %v131
  %v181 = vpop.f32.mrf.mxu0
  %v182 = vadd.f32 %v44, %v181
  %v183 = vpop.f32.mrf.mxu0
  %184 = vdwg.mxu0
  %v185 = vmax.f32 %v143, 0.0
  %v186 = vmax.f32 %v156, 0.0
  %v187 = vmax.f32 %v169, 0.0
  %v188 = vmax.f32 %v182, 0.0
  %v189 = vpack.c.bf16 %v185, %v185
  %v190 = vpack.c.bf16 %v186, %v186
  %v191 = vpack.c.bf16 %v187, %v187
  %v192 = vpack.c.bf16 %v188, %v188
  %v193 = vld [vmem:[%s3] sm:$0xf]
  %v194 = vld [vmem:[%s3 + $0x4] sm:$0xf]
  %v195 = vld [vmem:[%s3 + $0x8] sm:$0xf]
  %v196 = vld [vmem:[%s3 + $0xc] sm:$0xf]
  %v197 = vld [vmem:[%s3 + $0x10] sm:$0xf]
  %v198 = vld [vmem:[%s3 + $0x14] sm:$0xf]
  %v199 = vld [vmem:[%s3 + $0x18] sm:$0xf]
  %v200 = vld [vmem:[%s3 + $0x1c] sm:$0xf]
  %v201 = vld [vmem:[%s3 + $0x20] sm:$0xf]
  %v202 = vld [vmem:[%s3 + $0x24] sm:$0xf]
  %v203 = vld [vmem:[%s3 + $0x28] sm:$0xf]
  %v204 = vld [vmem:[%s3 + $0x2c] sm:$0xf]
  %v205 = vld [vmem:[%s3 + $0x30] sm:$0xf]
  %v206 = vld [vmem:[%s3 + $0x34] sm:$0xf]
  %v207 = vld [vmem:[%s3 + $0x38] sm:$0xf]
  %v208 = vld [vmem:[%s3 + $0x3c] sm:$0xf]
  %v209 = vld [vmem:[%s3 + $0x40] sm:$0xf]
  %v210 = vld [vmem:[%s3 + $0x44] sm:$0xf]
  %v211 = vld [vmem:[%s3 + $0x48] sm:$0xf]
  %v212 = vld [vmem:[%s3 + $0x4c] sm:$0xf]
  %v213 = vld [vmem:[%s3 + $0x50] sm:$0xf]
  %v214 = vld [vmem:[%s3 + $0x54] sm:$0xf]
  %v215 = vld [vmem:[%s3 + $0x58] sm:$0xf]
  %v216 = vld [vmem:[%s3 + $0x5c] sm:$0xf]
  %v217 = vld [vmem:[%s3 + $0x60] sm:$0xf]
  %v218 = vld [vmem:[%s3 + $0x64] sm:$0xf]
  %v219 = vld [vmem:[%s3 + $0x68] sm:$0xf]
  %v220 = vld [vmem:[%s3 + $0x6c] sm:$0xf]
  %v221 = vld [vmem:[%s3 + $0x70] sm:$0xf]
  %v222 = vld [vmem:[%s3 + $0x74] sm:$0xf]
  %v223 = vld [vmem:[%s3 + $0x78] sm:$0xf]
  %v224 = vld [vmem:[%s3 + $0x7c] sm:$0xf]
  %v225 = vld [vmem:[%s3 + $0x80] sm:$0xf]
  %v226 = vld [vmem:[%s3 + $0x84] sm:$0xf]
  %v227 = vld [vmem:[%s3 + $0x88] sm:$0xf]
  %v228 = vld [vmem:[%s3 + $0x8c] sm:$0xf]
  %v229 = vld [vmem:[%s3 + $0x90] sm:$0xf]
  %v230 = vld [vmem:[%s3 + $0x94] sm:$0xf]
  %v231 = vld [vmem:[%s3 + $0x98] sm:$0xf]
  %v232 = vld [vmem:[%s3 + $0x9c] sm:$0xf]
  %v233 = vld [vmem:[%s3 + $0xa0] sm:$0xf]
  %v234 = vld [vmem:[%s3 + $0xa4] sm:$0xf]
  %v235 = vld [vmem:[%s3 + $0xa8] sm:$0xf]
  %v236 = vld [vmem:[%s3 + $0xac] sm:$0xf]
  %v237 = vld [vmem:[%s3 + $0xb0] sm:$0xf]
  %v238 = vld [vmem:[%s3 + $0xb4] sm:$0xf]
  %v239 = vld [vmem:[%s3 + $0xb8] sm:$0xf]
  %v240 = vld [vmem:[%s3 + $0xbc] sm:$0xf]
  %v241 = vld [vmem:[%s3 + $0xc0] sm:$0xf]
  %v242 = vld [vmem:[%s3 + $0xc4] sm:$0xf]
  %v243 = vld [vmem:[%s3 + $0xc8] sm:$0xf]
  %v244 = vld [vmem:[%s3 + $0xcc] sm:$0xf]
  %v245 = vld [vmem:[%s3 + $0xd0] sm:$0xf]
  %v246 = vld [vmem:[%s3 + $0xd4] sm:$0xf]
  %v247 = vld [vmem:[%s3 + $0xd8] sm:$0xf]
  %v248 = vld [vmem:[%s3 + $0xdc] sm:$0xf]
  %v249 = vld [vmem:[%s3 + $0xe0] sm:$0xf]
  %v250 = vld [vmem:[%s3 + $0xe4] sm:$0xf]
  %v251 = vld [vmem:[%s3 + $0xe8] sm:$0xf]
  %v252 = vld [vmem:[%s3 + $0xec] sm:$0xf]
  %v253 = vld [vmem:[%s3 + $0xf0] sm:$0xf]
  %v254 = vld [vmem:[%s3 + $0xf4] sm:$0xf]
  %v255 = vld [vmem:[%s3 + $0xf8] sm:$0xf]
  %v256 = vld [vmem:[%s3 + $0xfc] sm:$0xf]
  %v257 = vld [vmem:[%s4] sm:$0x1]
  %v259 = vperm.slane %v257, 0
  %v325 = vunpack.c.l.b16 %v193
  %v326 = vunpack.c.l.b16 %v194
  %v327 = vunpack.c.l.b16 %v195
  %v328 = vunpack.c.l.b16 %v196
  %v329 = vunpack.c.l.b16 %v197
  %v330 = vunpack.c.l.b16 %v198
  %v331 = vunpack.c.l.b16 %v199
  %v332 = vunpack.c.l.b16 %v200
  %v333 = vunpack.c.l.b16 %v201
  %v334 = vunpack.c.l.b16 %v202
  %v335 = vunpack.c.l.b16 %v203
  %v336 = vunpack.c.l.b16 %v204
  %v337 = vunpack.c.l.b16 %v205
  %v338 = vunpack.c.l.b16 %v206
  %v339 = vunpack.c.l.b16 %v207
  %v340 = vunpack.c.l.b16 %v208
  %v341 = vunpack.c.l.b16 %v209
  %v342 = vunpack.c.l.b16 %v210
  %v343 = vunpack.c.l.b16 %v211
  %v344 = vunpack.c.l.b16 %v212
  %v345 = vunpack.c.l.b16 %v213
  %v346 = vunpack.c.l.b16 %v214
  %v347 = vunpack.c.l.b16 %v215
  %v348 = vunpack.c.l.b16 %v216
  %v349 = vunpack.c.l.b16 %v217
  %v350 = vunpack.c.l.b16 %v218
  %v351 = vunpack.c.l.b16 %v219
  %v352 = vunpack.c.l.b16 %v220
  %v353 = vunpack.c.l.b16 %v221
  %v354 = vunpack.c.l.b16 %v222
  %v355 = vunpack.c.l.b16 %v223
  %v356 = vunpack.c.l.b16 %v224
  %v357 = vunpack.c.l.b16 %v225
  %v358 = vunpack.c.l.b16 %v226
  %v359 = vunpack.c.l.b16 %v227
  %v360 = vunpack.c.l.b16 %v228
  %v361 = vunpack.c.l.b16 %v229
  %v362 = vunpack.c.l.b16 %v230
  %v363 = vunpack.c.l.b16 %v231
  %v364 = vunpack.c.l.b16 %v232
  %v365 = vunpack.c.l.b16 %v233
  %v366 = vunpack.c.l.b16 %v234
  %v367 = vunpack.c.l.b16 %v235
  %v368 = vunpack.c.l.b16 %v236
  %v369 = vunpack.c.l.b16 %v237
  %v370 = vunpack.c.l.b16 %v238
  %v371 = vunpack.c.l.b16 %v239
  %v372 = vunpack.c.l.b16 %v240
  %v373 = vunpack.c.l.b16 %v241
  %v374 = vunpack.c.l.b16 %v242
  %v375 = vunpack.c.l.b16 %v243
  %v376 = vunpack.c.l.b16 %v244
  %v377 = vunpack.c.l.b16 %v245
  %v378 = vunpack.c.l.b16 %v246
  %v379 = vunpack.c.l.b16 %v247
  %v380 = vunpack.c.l.b16 %v248
  %v381 = vunpack.c.l.b16 %v249
  %v382 = vunpack.c.l.b16 %v250
  %v383 = vunpack.c.l.b16 %v251
  %v384 = vunpack.c.l.b16 %v252
  %v385 = vunpack.c.l.b16 %v253
  %v386 = vunpack.c.l.b16 %v254
  %v387 = vunpack.c.l.b16 %v255
  %v388 = vunpack.c.l.b16 %v256
  %v389 = vpack.c.b16 %v326, %v325
  %v390 = vpack.c.b16 %v328, %v327
  %v391 = vpack.c.b16 %v330, %v329
  %v392 = vpack.c.b16 %v332, %v331
  %v393 = vpack.c.b16 %v334, %v333
  %v394 = vpack.c.b16 %v336, %v335
  %v395 = vpack.c.b16 %v338, %v337
  %v396 = vpack.c.b16 %v340, %v339
  %v397 = vpack.c.b16 %v342, %v341
  %v398 = vpack.c.b16 %v344, %v343
  %v399 = vpack.c.b16 %v346, %v345
  %v400 = vpack.c.b16 %v348, %v347
  %v401 = vpack.c.b16 %v350, %v349
  %v402 = vpack.c.b16 %v352, %v351
  %v403 = vpack.c.b16 %v354, %v353
  %v404 = vpack.c.b16 %v356, %v355
  %v405 = vpack.c.b16 %v358, %v357
  %v406 = vpack.c.b16 %v360, %v359
  %v407 = vpack.c.b16 %v362, %v361
  %v408 = vpack.c.b16 %v364, %v363
  %v409 = vpack.c.b16 %v366, %v365
  %v410 = vpack.c.b16 %v368, %v367
  %v411 = vpack.c.b16 %v370, %v369
  %v412 = vpack.c.b16 %v372, %v371
  %v413 = vpack.c.b16 %v374, %v373
  %v414 = vpack.c.b16 %v376, %v375
  %v415 = vpack.c.b16 %v378, %v377
  %v416 = vpack.c.b16 %v380, %v379
  %v417 = vpack.c.b16 %v382, %v381
  %v418 = vpack.c.b16 %v384, %v383
  %v419 = vpack.c.b16 %v386, %v385
  %v420 = vpack.c.b16 %v388, %v387
  %453 = vmatpush.bf16.msra.mxu0 %v396
  %454 = vmatpush.bf16.msra.mxu0 %v395
  %455 = vmatpush.bf16.msra.mxu0 %v394
  %456 = vmatpush.bf16.msra.mxu0 %v393
  %457 = vmatpush.bf16.msra.mxu0 %v392
  %458 = vmatpush.bf16.msra.mxu0 %v391
  %459 = vmatpush.bf16.msra.mxu0 %v390
  %460 = vmatpush.bf16.msra.mxu0 %v389
  %461 = vmatmul.bf16.gmra.mxu0 %v189
  %v462 = vpop.f32.mrf.mxu0
  %v463 = vadd.f32 %v259, %v462
  %v464 = vpop.f32.mrf.mxu0
  %465 = vdwg.mxu0
  %466 = vmatpush.bf16.msra.mxu0 %v404
  %467 = vmatpush.bf16.msra.mxu0 %v403
  %468 = vmatpush.bf16.msra.mxu0 %v402
  %469 = vmatpush.bf16.msra.mxu0 %v401
  %470 = vmatpush.bf16.msra.mxu0 %v400
  %471 = vmatpush.bf16.msra.mxu0 %v399
  %472 = vmatpush.bf16.msra.mxu0 %v398
  %473 = vmatpush.bf16.msra.mxu0 %v397
  %474 = vmatmul.bf16.gmra.mxu0 %v190
  %v475 = vpop.f32.mrf.mxu0
  %v476 = vadd.f32 %v463, %v475
  %v477 = vpop.f32.mrf.mxu0
  %478 = vdwg.mxu0
  %479 = vmatpush.bf16.msra.mxu0 %v412
  %480 = vmatpush.bf16.msra.mxu0 %v411
  %481 = vmatpush.bf16.msra.mxu0 %v410
  %482 = vmatpush.bf16.msra.mxu0 %v409
  %483 = vmatpush.bf16.msra.mxu0 %v408
  %484 = vmatpush.bf16.msra.mxu0 %v407
  %485 = vmatpush.bf16.msra.mxu0 %v406
  %486 = vmatpush.bf16.msra.mxu0 %v405
  %487 = vmatmul.bf16.gmra.mxu0 %v191
  %v488 = vpop.f32.mrf.mxu0
  %v489 = vadd.f32 %v476, %v488
  %v490 = vpop.f32.mrf.mxu0
  %491 = vdwg.mxu0
  %492 = vmatpush.bf16.msra.mxu0 %v420
  %493 = vmatpush.bf16.msra.mxu0 %v419
  %494 = vmatpush.bf16.msra.mxu0 %v418
  %495 = vmatpush.bf16.msra.mxu0 %v417
  %496 = vmatpush.bf16.msra.mxu0 %v416
  %497 = vmatpush.bf16.msra.mxu0 %v415
  %498 = vmatpush.bf16.msra.mxu0 %v414
  %499 = vmatpush.bf16.msra.mxu0 %v413
  %500 = vmatmul.bf16.gmra.mxu0 %v192
  %v501 = vpop.f32.mrf.mxu0
  %v502 = vadd.f32 %v489, %v501
  %v503 = vpop.f32.mrf.mxu0
  %504 = vdwg.mxu0
  %vm505 = vcmask 1041408
  %v506 = vsel %vm505, %v502, 0.0
  %507 = vadd.xlane.f32.xlu0 %v506
  %v508 = vpop.xlane.xlu0 %507
  %v509 = vsub.f32 %v508, %v502
  %v510 = vmul.f32 %v509, 0.16666667
  %512 = vset.pattern.permute.xlu0 0
  %513 = vperm.xlu0 %512, %v502
  %v514 = vpop.permute.xlu0 %513
  %v516 = vadd.f32 %v514, %v502
  %518 = vset.pattern.permute.xlu0 0
  %519 = vperm.xlu0 %518, %v510
  %v520 = vpop.permute.xlu0 %519
  %v522 = vsub.f32 %v516, %v520
  %523 = vst [vmem:[%s5] sm:$0x3] %v522
  // Predicated region
  $region22: #{dueling_q_network.7} parent=0 // pred_check
    _
  $region23: #{dueling_q_network.7} parent=0 // pred_check_branch
    %525 = sbr.rel (0) target = $region25
  $region24: #{dueling_q_network.7} parent=0 // pred_region
    _
  $region25: #{dueling_q_network.7} parent=0 // pred_fallthru
    _
  // Predicated region
  $region26: #{dueling_q_network.7} parent=0 // pred_check
    _
  $region27: #{dueling_q_network.7} parent=0 // pred_check_branch
    %527 = sbr.rel (0) target = $region29
  $region28: #{dueling_q_network.7} parent=0 // pred_region
    _
  $region29: #{dueling_q_network.7} parent=0 // pred_fallthru
    _

</llo_original>
